<compile_context>
chip_gen: v7x
topology: tpu7x:2x2x1
jax: 0.10.0
libtpu: 0.0.40
codegen_flags: <defaults>
</compile_context>

<pallas_src>
import jax
import jax.numpy as jnp
from jax.experimental import pallas as pl
from jax.experimental.pallas import tpu as pltpu

INPUT_SIZE = 8
HIDDEN = 64
OUT_SIZE = 8
OUT_PAD = 128      # pad the final-linear output to a full 128-lane vreg


def _make_kernel(seq_len, batch):
    H = HIDDEN

    def kernel(x_ref, wih_ref, whh_ref, b_ref, wout_ref, bout_ref, out_ref, h_all):
        """Whole-sequence LSTM + output projection in one invocation.

        x_ref:    (S*B, INPUT_SIZE)   time-major rows (row t*B+b = timestep t, batch b)
        wih_ref:  (INPUT_SIZE, 4*H)   W_ih^T   (PyTorch gate order i, f, g, o;
                                      g-gate columns pre-scaled by 2)
        whh_ref:  (HIDDEN, 4*H)       W_hh^T   (g-gate columns pre-scaled by 2)
        b_ref:    (1, 4*H)            b_ih + b_hh (g entries pre-scaled by 2)
        wout_ref: (HIDDEN, OUT_PAD)   W_out^T zero-padded to 128 cols
        bout_ref: (1, OUT_PAD)        b_out zero-padded to 128 cols
        out_ref:  (S*B, OUT_PAD)      lane-dense output slab
        h_all:    (S*B, HIDDEN) f32   VMEM scratch holding every h_t
        """
        # (1) Hoisted input projection for ALL timesteps + bias, one matmul.
        gates_x = (jnp.dot(x_ref[...], wih_ref[...],
                           preferred_element_type=jnp.float32)
                   + b_ref[...])                                # (S*B, 4H)
        whh = whh_ref[...]                                      # loaded once

        h = jnp.zeros((batch, H), jnp.float32)
        c = jnp.zeros((batch, H), jnp.float32)

        # (2) Sequential recurrence, fully unrolled (static trip count).
        #     Body = h @ W_hh, ONE sigmoid over the whole gate slab, then the
        #     cheap VPU combine.  tanh(g) is recovered as 2*sigmoid(2g) - 1
        #     (the factor 2 was folded into the g-gate weights host-side).
        for t in range(seq_len):
            gates = gates_x[t * batch:(t + 1) * batch, :] + jnp.dot(
                h, whh, preferred_element_type=jnp.float32)     # (B, 4H)
            sig = jax.nn.sigmoid(gates)                         # single EUP pass
            i_g = sig[:, 0 * H:1 * H]
            f_g = sig[:, 1 * H:2 * H]
            g_g = 2.0 * sig[:, 2 * H:3 * H] - 1.0               # == tanh(pre-gate)
            o_g = sig[:, 3 * H:4 * H]
            c = f_g * c + i_g * g_g
            h = o_g * jnp.tanh(c)
            h_all[t * batch:(t + 1) * batch, :] = h             # stash h_t (static slice)

        # (3) One output projection over all timesteps + a single lane-dense store.
        out_ref[...] = (jnp.dot(h_all[...], wout_ref[...],
                                preferred_element_type=jnp.float32)
                        + bout_ref[...]).astype(out_ref.dtype)

    return kernel


def rnn_forward(x, params):
    """x: (B, S, INPUT_SIZE) batch-first, like the PyTorch module."""
    B, S, I = x.shape
    assert I == INPUT_SIZE
    H = HIDDEN

    # Time-major rows: row t*B + b holds x[b, t, :].
    x_rows = jnp.transpose(x, (1, 0, 2)).reshape(S * B, INPUT_SIZE)

    # Pre-scale the g-gate (columns [2H, 3H)) by 2 so the kernel can use the
    # identity tanh(x) = 2*sigmoid(2x) - 1 and apply a single sigmoid per step.
    gate_scale = jnp.ones((4 * H,), jnp.float32).at[2 * H:3 * H].set(2.0)

    wih_t = params["w_ih"].T * gate_scale[None, :]              # (I, 4H)
    whh_t = params["w_hh"].T * gate_scale[None, :]              # (H, 4H)
    b = ((params["b_ih"] + params["b_hh"]) * gate_scale)[None, :]  # (1, 4H)

    # Zero-pad the output projection to 128 lanes for a lane-dense store.
    wout_pad = jnp.zeros((HIDDEN, OUT_PAD), jnp.float32)
    wout_pad = wout_pad.at[:, :OUT_SIZE].set(params["w_out"].T)
    bout_pad = jnp.zeros((1, OUT_PAD), jnp.float32)
    bout_pad = bout_pad.at[:, :OUT_SIZE].set(params["b_out"][None, :])

    out_pad = pl.pallas_call(
        _make_kernel(S, B),
        out_shape=jax.ShapeDtypeStruct((S * B, OUT_PAD), jnp.float32),
        in_specs=[pl.BlockSpec(memory_space=pltpu.MemorySpace.VMEM)] * 6,
        out_specs=pl.BlockSpec(memory_space=pltpu.MemorySpace.VMEM),
        scratch_shapes=[pltpu.VMEM((S * B, HIDDEN), jnp.float32)],   # all h_t
    )(x_rows, wih_t, whh_t, b, wout_pad, bout_pad)

    out_tm = out_pad[:, :OUT_SIZE].reshape(S, B, OUT_SIZE)      # (S, B, OUT)
    return jnp.transpose(out_tm, (1, 0, 2)).astype(x.dtype)     # (B, S, OUT)


def init_params(key):
    """Deterministic init matching PyTorch shapes: U(-1/sqrt(H), 1/sqrt(H))."""
    k = 1.0 / jnp.sqrt(jnp.float32(HIDDEN))
    ks = jax.random.split(key, 6)
    u = lambda kk, shape: jax.random.uniform(kk, shape, jnp.float32, -k, k)
    return {
        "w_ih": u(ks[0], (4 * HIDDEN, INPUT_SIZE)),   # weight_ih_l0
        "w_hh": u(ks[1], (4 * HIDDEN, HIDDEN)),       # weight_hh_l0
        "b_ih": u(ks[2], (4 * HIDDEN,)),              # bias_ih_l0
        "b_hh": u(ks[3], (4 * HIDDEN,)),              # bias_hh_l0
        "w_out": u(ks[4], (OUT_SIZE, HIDDEN)),        # out.weight
        "b_out": u(ks[5], (OUT_SIZE,)),               # out.bias
    }


def rnn_reference(x, params):
    """Pure-JAX reference (lax.scan over time) mirroring PyTorch semantics."""
    B, S, _ = x.shape
    wih_t = params["w_ih"].T
    whh_t = params["w_hh"].T
    b = params["b_ih"] + params["b_hh"]

    def step(carry, x_t):
        h, c = carry
        gates = x_t @ wih_t + h @ whh_t + b
        i_g = jax.nn.sigmoid(gates[:, 0 * HIDDEN:1 * HIDDEN])
        f_g = jax.nn.sigmoid(gates[:, 1 * HIDDEN:2 * HIDDEN])
        g_g = jnp.tanh(gates[:, 2 * HIDDEN:3 * HIDDEN])
        o_g = jax.nn.sigmoid(gates[:, 3 * HIDDEN:4 * HIDDEN])
        c_new = f_g * c + i_g * g_g
        h_new = o_g * jnp.tanh(c_new)
        return (h_new, c_new), h_new

    h0 = jnp.zeros((B, HIDDEN), jnp.float32)
    c0 = jnp.zeros((B, HIDDEN), jnp.float32)
    _, hs = jax.lax.scan(step, (h0, c0), jnp.transpose(x, (1, 0, 2)))
    r_out = jnp.transpose(hs, (1, 0, 2))                         # (B, S, HIDDEN)
    return r_out @ params["w_out"].T + params["b_out"]


if __name__ == "__main__":
    key = jax.random.PRNGKey(0)
    k_param, k_x = jax.random.split(key)

    params = init_params(k_param)
    B, S = 2, 8
    x = jax.random.normal(k_x, (B, S, INPUT_SIZE), jnp.float32)

    out = rnn_forward(x, params)
    out = jax.block_until_ready(out)

    ref = rnn_reference(x, params)
    assert out.shape == (B, S, OUT_SIZE)
    assert jnp.allclose(out, ref, atol=1e-4, rtol=1e-4), "mismatch vs reference"

    print("KERNEL_OK")
</pallas_src>

<mosaic_0001>
module attributes {stable_mosaic.version = 11 : i64} {
  func.func @kernel(%arg0: memref<16x8xf32, #tpu.memory_space<vmem>>, %arg1: memref<8x256xf32, #tpu.memory_space<vmem>>, %arg2: memref<64x256xf32, #tpu.memory_space<vmem>>, %arg3: memref<1x256xf32, #tpu.memory_space<vmem>>, %arg4: memref<64x128xf32, #tpu.memory_space<vmem>>, %arg5: memref<1x128xf32, #tpu.memory_space<vmem>>, %arg6: memref<16x128xf32, #tpu.memory_space<vmem>>, %arg7: memref<16x64xf32, #tpu.memory_space<vmem>>) attributes {dimension_semantics = [], scalar_prefetch = 0 : i64, scratch_operands = 1 : i64, tpu.core_type = #tpu.core_type<tc>} {
    %c0 = arith.constant 0 : index
    %c0_0 = arith.constant 0 : index
    %0 = vector.load %arg0[%c0, %c0_0] : memref<16x8xf32, #tpu.memory_space<vmem>>, vector<16x8xf32>
    %c0_1 = arith.constant 0 : index
    %c0_2 = arith.constant 0 : index
    %1 = vector.load %arg1[%c0_1, %c0_2] : memref<8x256xf32, #tpu.memory_space<vmem>>, vector<8x256xf32>
    %cst = arith.constant dense<0.000000e+00> : vector<16x256xf32>
    %2 = tpu.matmul %0, %1, %cst {dimension_numbers = #tpu.dot_dimension_numbers<[1], [0], [0], [1], [0, 0, 1, 1], [], []>} : vector<16x8xf32>, vector<8x256xf32>, vector<16x256xf32> -> vector<16x256xf32>
    %c0_3 = arith.constant 0 : index
    %c0_4 = arith.constant 0 : index
    %3 = vector.load %arg3[%c0_3, %c0_4] : memref<1x256xf32, #tpu.memory_space<vmem>>, vector<1x256xf32>
    %4 = vector.broadcast %3 : vector<1x256xf32> to vector<16x256xf32>
    %5 = arith.addf %2, %4 : vector<16x256xf32>
    %c0_5 = arith.constant 0 : index
    %c0_6 = arith.constant 0 : index
    %6 = vector.load %arg2[%c0_5, %c0_6] : memref<64x256xf32, #tpu.memory_space<vmem>>, vector<64x256xf32>
    %cst_7 = arith.constant 0.000000e+00 : f32
    %7 = vector.broadcast %cst_7 : f32 to vector<2x64xf32>
    %cst_8 = arith.constant 0.000000e+00 : f32
    %8 = vector.broadcast %cst_8 : f32 to vector<2x64xf32>
    %9 = vector.extract_strided_slice %5 {offsets = [0, 0], sizes = [2, 256], strides = [1, 1]} : vector<16x256xf32> to vector<2x256xf32>
    %cst_9 = arith.constant dense<0.000000e+00> : vector<2x256xf32>
    %10 = tpu.matmul %7, %6, %cst_9 {dimension_numbers = #tpu.dot_dimension_numbers<[1], [0], [0], [1], [0, 0, 1, 1], [], []>} : vector<2x64xf32>, vector<64x256xf32>, vector<2x256xf32> -> vector<2x256xf32>
    %11 = arith.addf %9, %10 : vector<2x256xf32>
    %12 = arith.negf %11 : vector<2x256xf32>
    %13 = math.exp %12 : vector<2x256xf32>
    %cst_10 = arith.constant 1.000000e+00 : f32
    %14 = vector.broadcast %cst_10 : f32 to vector<2x256xf32>
    %15 = arith.addf %14, %13 : vector<2x256xf32>
    %16 = arith.divf %14, %15 : vector<2x256xf32>
    %17 = vector.extract_strided_slice %16 {offsets = [0, 0], sizes = [2, 64], strides = [1, 1]} : vector<2x256xf32> to vector<2x64xf32>
    %18 = vector.extract_strided_slice %16 {offsets = [0, 64], sizes = [2, 64], strides = [1, 1]} : vector<2x256xf32> to vector<2x64xf32>
    %19 = vector.extract_strided_slice %16 {offsets = [0, 128], sizes = [2, 64], strides = [1, 1]} : vector<2x256xf32> to vector<2x64xf32>
    %cst_11 = arith.constant 2.000000e+00 : f32
    %20 = vector.broadcast %cst_11 : f32 to vector<2x64xf32>
    %21 = arith.mulf %20, %19 : vector<2x64xf32>
    %cst_12 = arith.constant 1.000000e+00 : f32
    %22 = vector.broadcast %cst_12 : f32 to vector<2x64xf32>
    %23 = arith.subf %21, %22 : vector<2x64xf32>
    %24 = vector.extract_strided_slice %16 {offsets = [0, 192], sizes = [2, 64], strides = [1, 1]} : vector<2x256xf32> to vector<2x64xf32>
    %25 = arith.mulf %18, %8 : vector<2x64xf32>
    %26 = arith.mulf %17, %23 : vector<2x64xf32>
    %27 = arith.addf %25, %26 : vector<2x64xf32>
    %28 = math.tanh %27 : vector<2x64xf32>
    %29 = arith.mulf %24, %28 : vector<2x64xf32>
    %c0_13 = arith.constant 0 : index
    %c0_14 = arith.constant 0 : index
    %30 = vector.load %arg7[%c0_13, %c0_14] : memref<16x64xf32, #tpu.memory_space<vmem>>, vector<2x64xf32>
    tpu.vector_store %arg7[%c0_13, %c0_14], %29 {strides = array<i32>} : memref<16x64xf32, #tpu.memory_space<vmem>>, vector<2x64xf32>,
    %31 = vector.extract_strided_slice %5 {offsets = [2, 0], sizes = [2, 256], strides = [1, 1]} : vector<16x256xf32> to vector<2x256xf32>
    %cst_15 = arith.constant dense<0.000000e+00> : vector<2x256xf32>
    %32 = tpu.matmul %29, %6, %cst_15 {dimension_numbers = #tpu.dot_dimension_numbers<[1], [0], [0], [1], [0, 0, 1, 1], [], []>} : vector<2x64xf32>, vector<64x256xf32>, vector<2x256xf32> -> vector<2x256xf32>
    %33 = arith.addf %31, %32 : vector<2x256xf32>
    %34 = arith.negf %33 : vector<2x256xf32>
    %35 = math.exp %34 : vector<2x256xf32>
    %cst_16 = arith.constant 1.000000e+00 : f32
    %36 = vector.broadcast %cst_16 : f32 to vector<2x256xf32>
    %37 = arith.addf %36, %35 : vector<2x256xf32>
    %38 = arith.divf %36, %37 : vector<2x256xf32>
    %39 = vector.extract_strided_slice %38 {offsets = [0, 0], sizes = [2, 64], strides = [1, 1]} : vector<2x256xf32> to vector<2x64xf32>
    %40 = vector.extract_strided_slice %38 {offsets = [0, 64], sizes = [2, 64], strides = [1, 1]} : vector<2x256xf32> to vector<2x64xf32>
    %41 = vector.extract_strided_slice %38 {offsets = [0, 128], sizes = [2, 64], strides = [1, 1]} : vector<2x256xf32> to vector<2x64xf32>
    %cst_17 = arith.constant 2.000000e+00 : f32
    %42 = vector.broadcast %cst_17 : f32 to vector<2x64xf32>
    %43 = arith.mulf %42, %41 : vector<2x64xf32>
    %cst_18 = arith.constant 1.000000e+00 : f32
    %44 = vector.broadcast %cst_18 : f32 to vector<2x64xf32>
    %45 = arith.subf %43, %44 : vector<2x64xf32>
    %46 = vector.extract_strided_slice %38 {offsets = [0, 192], sizes = [2, 64], strides = [1, 1]} : vector<2x256xf32> to vector<2x64xf32>
    %47 = arith.mulf %40, %27 : vector<2x64xf32>
    %48 = arith.mulf %39, %45 : vector<2x64xf32>
    %49 = arith.addf %47, %48 : vector<2x64xf32>
    %50 = math.tanh %49 : vector<2x64xf32>
    %51 = arith.mulf %46, %50 : vector<2x64xf32>
    %c2 = arith.constant 2 : index
    %c0_19 = arith.constant 0 : index
    %52 = vector.load %arg7[%c2, %c0_19] : memref<16x64xf32, #tpu.memory_space<vmem>>, vector<2x64xf32>
    tpu.vector_store %arg7[%c2, %c0_19], %51 {strides = array<i32>} : memref<16x64xf32, #tpu.memory_space<vmem>>, vector<2x64xf32>,
    %53 = vector.extract_strided_slice %5 {offsets = [4, 0], sizes = [2, 256], strides = [1, 1]} : vector<16x256xf32> to vector<2x256xf32>
    %cst_20 = arith.constant dense<0.000000e+00> : vector<2x256xf32>
    %54 = tpu.matmul %51, %6, %cst_20 {dimension_numbers = #tpu.dot_dimension_numbers<[1], [0], [0], [1], [0, 0, 1, 1], [], []>} : vector<2x64xf32>, vector<64x256xf32>, vector<2x256xf32> -> vector<2x256xf32>
    %55 = arith.addf %53, %54 : vector<2x256xf32>
    %56 = arith.negf %55 : vector<2x256xf32>
    %57 = math.exp %56 : vector<2x256xf32>
    %cst_21 = arith.constant 1.000000e+00 : f32
    %58 = vector.broadcast %cst_21 : f32 to vector<2x256xf32>
    %59 = arith.addf %58, %57 : vector<2x256xf32>
    %60 = arith.divf %58, %59 : vector<2x256xf32>
    %61 = vector.extract_strided_slice %60 {offsets = [0, 0], sizes = [2, 64], strides = [1, 1]} : vector<2x256xf32> to vector<2x64xf32>
    %62 = vector.extract_strided_slice %60 {offsets = [0, 64], sizes = [2, 64], strides = [1, 1]} : vector<2x256xf32> to vector<2x64xf32>
    %63 = vector.extract_strided_slice %60 {offsets = [0, 128], sizes = [2, 64], strides = [1, 1]} : vector<2x256xf32> to vector<2x64xf32>
    %cst_22 = arith.constant 2.000000e+00 : f32
    %64 = vector.broadcast %cst_22 : f32 to vector<2x64xf32>
    %65 = arith.mulf %64, %63 : vector<2x64xf32>
    %cst_23 = arith.constant 1.000000e+00 : f32
    %66 = vector.broadcast %cst_23 : f32 to vector<2x64xf32>
    %67 = arith.subf %65, %66 : vector<2x64xf32>
    %68 = vector.extract_strided_slice %60 {offsets = [0, 192], sizes = [2, 64], strides = [1, 1]} : vector<2x256xf32> to vector<2x64xf32>
    %69 = arith.mulf %62, %49 : vector<2x64xf32>
    %70 = arith.mulf %61, %67 : vector<2x64xf32>
    %71 = arith.addf %69, %70 : vector<2x64xf32>
    %72 = math.tanh %71 : vector<2x64xf32>
    %73 = arith.mulf %68, %72 : vector<2x64xf32>
    %c4 = arith.constant 4 : index
    %c0_24 = arith.constant 0 : index
    %74 = vector.load %arg7[%c4, %c0_24] : memref<16x64xf32, #tpu.memory_space<vmem>>, vector<2x64xf32>
    tpu.vector_store %arg7[%c4, %c0_24], %73 {strides = array<i32>} : memref<16x64xf32, #tpu.memory_space<vmem>>, vector<2x64xf32>,
    %75 = vector.extract_strided_slice %5 {offsets = [6, 0], sizes = [2, 256], strides = [1, 1]} : vector<16x256xf32> to vector<2x256xf32>
    %cst_25 = arith.constant dense<0.000000e+00> : vector<2x256xf32>
    %76 = tpu.matmul %73, %6, %cst_25 {dimension_numbers = #tpu.dot_dimension_numbers<[1], [0], [0], [1], [0, 0, 1, 1], [], []>} : vector<2x64xf32>, vector<64x256xf32>, vector<2x256xf32> -> vector<2x256xf32>
    %77 = arith.addf %75, %76 : vector<2x256xf32>
    %78 = arith.negf %77 : vector<2x256xf32>
    %79 = math.exp %78 : vector<2x256xf32>
    %cst_26 = arith.constant 1.000000e+00 : f32
    %80 = vector.broadcast %cst_26 : f32 to vector<2x256xf32>
    %81 = arith.addf %80, %79 : vector<2x256xf32>
    %82 = arith.divf %80, %81 : vector<2x256xf32>
    %83 = vector.extract_strided_slice %82 {offsets = [0, 0], sizes = [2, 64], strides = [1, 1]} : vector<2x256xf32> to vector<2x64xf32>
    %84 = vector.extract_strided_slice %82 {offsets = [0, 64], sizes = [2, 64], strides = [1, 1]} : vector<2x256xf32> to vector<2x64xf32>
    %85 = vector.extract_strided_slice %82 {offsets = [0, 128], sizes = [2, 64], strides = [1, 1]} : vector<2x256xf32> to vector<2x64xf32>
    %cst_27 = arith.constant 2.000000e+00 : f32
    %86 = vector.broadcast %cst_27 : f32 to vector<2x64xf32>
    %87 = arith.mulf %86, %85 : vector<2x64xf32>
    %cst_28 = arith.constant 1.000000e+00 : f32
    %88 = vector.broadcast %cst_28 : f32 to vector<2x64xf32>
    %89 = arith.subf %87, %88 : vector<2x64xf32>
    %90 = vector.extract_strided_slice %82 {offsets = [0, 192], sizes = [2, 64], strides = [1, 1]} : vector<2x256xf32> to vector<2x64xf32>
    %91 = arith.mulf %84, %71 : vector<2x64xf32>
    %92 = arith.mulf %83, %89 : vector<2x64xf32>
    %93 = arith.addf %91, %92 : vector<2x64xf32>
    %94 = math.tanh %93 : vector<2x64xf32>
    %95 = arith.mulf %90, %94 : vector<2x64xf32>
    %c6 = arith.constant 6 : index
    %c0_29 = arith.constant 0 : index
    %96 = vector.load %arg7[%c6, %c0_29] : memref<16x64xf32, #tpu.memory_space<vmem>>, vector<2x64xf32>
    tpu.vector_store %arg7[%c6, %c0_29], %95 {strides = array<i32>} : memref<16x64xf32, #tpu.memory_space<vmem>>, vector<2x64xf32>,
    %97 = vector.extract_strided_slice %5 {offsets = [8, 0], sizes = [2, 256], strides = [1, 1]} : vector<16x256xf32> to vector<2x256xf32>
    %cst_30 = arith.constant dense<0.000000e+00> : vector<2x256xf32>
    %98 = tpu.matmul %95, %6, %cst_30 {dimension_numbers = #tpu.dot_dimension_numbers<[1], [0], [0], [1], [0, 0, 1, 1], [], []>} : vector<2x64xf32>, vector<64x256xf32>, vector<2x256xf32> -> vector<2x256xf32>
    %99 = arith.addf %97, %98 : vector<2x256xf32>
    %100 = arith.negf %99 : vector<2x256xf32>
    %101 = math.exp %100 : vector<2x256xf32>
    %cst_31 = arith.constant 1.000000e+00 : f32
    %102 = vector.broadcast %cst_31 : f32 to vector<2x256xf32>
    %103 = arith.addf %102, %101 : vector<2x256xf32>
    %104 = arith.divf %102, %103 : vector<2x256xf32>
    %105 = vector.extract_strided_slice %104 {offsets = [0, 0], sizes = [2, 64], strides = [1, 1]} : vector<2x256xf32> to vector<2x64xf32>
    %106 = vector.extract_strided_slice %104 {offsets = [0, 64], sizes = [2, 64], strides = [1, 1]} : vector<2x256xf32> to vector<2x64xf32>
    %107 = vector.extract_strided_slice %104 {offsets = [0, 128], sizes = [2, 64], strides = [1, 1]} : vector<2x256xf32> to vector<2x64xf32>
    %cst_32 = arith.constant 2.000000e+00 : f32
    %108 = vector.broadcast %cst_32 : f32 to vector<2x64xf32>
    %109 = arith.mulf %108, %107 : vector<2x64xf32>
    %cst_33 = arith.constant 1.000000e+00 : f32
    %110 = vector.broadcast %cst_33 : f32 to vector<2x64xf32>
    %111 = arith.subf %109, %110 : vector<2x64xf32>
    %112 = vector.extract_strided_slice %104 {offsets = [0, 192], sizes = [2, 64], strides = [1, 1]} : vector<2x256xf32> to vector<2x64xf32>
    %113 = arith.mulf %106, %93 : vector<2x64xf32>
    %114 = arith.mulf %105, %111 : vector<2x64xf32>
    %115 = arith.addf %113, %114 : vector<2x64xf32>
    %116 = math.tanh %115 : vector<2x64xf32>
    %117 = arith.mulf %112, %116 : vector<2x64xf32>
    %c8 = arith.constant 8 : index
    %c0_34 = arith.constant 0 : index
    %118 = vector.load %arg7[%c8, %c0_34] : memref<16x64xf32, #tpu.memory_space<vmem>>, vector<2x64xf32>
    tpu.vector_store %arg7[%c8, %c0_34], %117 {strides = array<i32>} : memref<16x64xf32, #tpu.memory_space<vmem>>, vector<2x64xf32>,
    %119 = vector.extract_strided_slice %5 {offsets = [10, 0], sizes = [2, 256], strides = [1, 1]} : vector<16x256xf32> to vector<2x256xf32>
    %cst_35 = arith.constant dense<0.000000e+00> : vector<2x256xf32>
    %120 = tpu.matmul %117, %6, %cst_35 {dimension_numbers = #tpu.dot_dimension_numbers<[1], [0], [0], [1], [0, 0, 1, 1], [], []>} : vector<2x64xf32>, vector<64x256xf32>, vector<2x256xf32> -> vector<2x256xf32>
    %121 = arith.addf %119, %120 : vector<2x256xf32>
    %122 = arith.negf %121 : vector<2x256xf32>
    %123 = math.exp %122 : vector<2x256xf32>
    %cst_36 = arith.constant 1.000000e+00 : f32
    %124 = vector.broadcast %cst_36 : f32 to vector<2x256xf32>
    %125 = arith.addf %124, %123 : vector<2x256xf32>
    %126 = arith.divf %124, %125 : vector<2x256xf32>
    %127 = vector.extract_strided_slice %126 {offsets = [0, 0], sizes = [2, 64], strides = [1, 1]} : vector<2x256xf32> to vector<2x64xf32>
    %128 = vector.extract_strided_slice %126 {offsets = [0, 64], sizes = [2, 64], strides = [1, 1]} : vector<2x256xf32> to vector<2x64xf32>
    %129 = vector.extract_strided_slice %126 {offsets = [0, 128], sizes = [2, 64], strides = [1, 1]} : vector<2x256xf32> to vector<2x64xf32>
    %cst_37 = arith.constant 2.000000e+00 : f32
    %130 = vector.broadcast %cst_37 : f32 to vector<2x64xf32>
    %131 = arith.mulf %130, %129 : vector<2x64xf32>
    %cst_38 = arith.constant 1.000000e+00 : f32
    %132 = vector.broadcast %cst_38 : f32 to vector<2x64xf32>
    %133 = arith.subf %131, %132 : vector<2x64xf32>
    %134 = vector.extract_strided_slice %126 {offsets = [0, 192], sizes = [2, 64], strides = [1, 1]} : vector<2x256xf32> to vector<2x64xf32>
    %135 = arith.mulf %128, %115 : vector<2x64xf32>
    %136 = arith.mulf %127, %133 : vector<2x64xf32>
    %137 = arith.addf %135, %136 : vector<2x64xf32>
    %138 = math.tanh %137 : vector<2x64xf32>
    %139 = arith.mulf %134, %138 : vector<2x64xf32>
    %c10 = arith.constant 10 : index
    %c0_39 = arith.constant 0 : index
    %140 = vector.load %arg7[%c10, %c0_39] : memref<16x64xf32, #tpu.memory_space<vmem>>, vector<2x64xf32>
    tpu.vector_store %arg7[%c10, %c0_39], %139 {strides = array<i32>} : memref<16x64xf32, #tpu.memory_space<vmem>>, vector<2x64xf32>,
    %141 = vector.extract_strided_slice %5 {offsets = [12, 0], sizes = [2, 256], strides = [1, 1]} : vector<16x256xf32> to vector<2x256xf32>
    %cst_40 = arith.constant dense<0.000000e+00> : vector<2x256xf32>
    %142 = tpu.matmul %139, %6, %cst_40 {dimension_numbers = #tpu.dot_dimension_numbers<[1], [0], [0], [1], [0, 0, 1, 1], [], []>} : vector<2x64xf32>, vector<64x256xf32>, vector<2x256xf32> -> vector<2x256xf32>
    %143 = arith.addf %141, %142 : vector<2x256xf32>
    %144 = arith.negf %143 : vector<2x256xf32>
    %145 = math.exp %144 : vector<2x256xf32>
    %cst_41 = arith.constant 1.000000e+00 : f32
    %146 = vector.broadcast %cst_41 : f32 to vector<2x256xf32>
    %147 = arith.addf %146, %145 : vector<2x256xf32>
    %148 = arith.divf %146, %147 : vector<2x256xf32>
    %149 = vector.extract_strided_slice %148 {offsets = [0, 0], sizes = [2, 64], strides = [1, 1]} : vector<2x256xf32> to vector<2x64xf32>
    %150 = vector.extract_strided_slice %148 {offsets = [0, 64], sizes = [2, 64], strides = [1, 1]} : vector<2x256xf32> to vector<2x64xf32>
    %151 = vector.extract_strided_slice %148 {offsets = [0, 128], sizes = [2, 64], strides = [1, 1]} : vector<2x256xf32> to vector<2x64xf32>
    %cst_42 = arith.constant 2.000000e+00 : f32
    %152 = vector.broadcast %cst_42 : f32 to vector<2x64xf32>
    %153 = arith.mulf %152, %151 : vector<2x64xf32>
    %cst_43 = arith.constant 1.000000e+00 : f32
    %154 = vector.broadcast %cst_43 : f32 to vector<2x64xf32>
    %155 = arith.subf %153, %154 : vector<2x64xf32>
    %156 = vector.extract_strided_slice %148 {offsets = [0, 192], sizes = [2, 64], strides = [1, 1]} : vector<2x256xf32> to vector<2x64xf32>
    %157 = arith.mulf %150, %137 : vector<2x64xf32>
    %158 = arith.mulf %149, %155 : vector<2x64xf32>
    %159 = arith.addf %157, %158 : vector<2x64xf32>
    %160 = math.tanh %159 : vector<2x64xf32>
    %161 = arith.mulf %156, %160 : vector<2x64xf32>
    %c12 = arith.constant 12 : index
    %c0_44 = arith.constant 0 : index
    %162 = vector.load %arg7[%c12, %c0_44] : memref<16x64xf32, #tpu.memory_space<vmem>>, vector<2x64xf32>
    tpu.vector_store %arg7[%c12, %c0_44], %161 {strides = array<i32>} : memref<16x64xf32, #tpu.memory_space<vmem>>, vector<2x64xf32>,
    %163 = vector.extract_strided_slice %5 {offsets = [14, 0], sizes = [2, 256], strides = [1, 1]} : vector<16x256xf32> to vector<2x256xf32>
    %cst_45 = arith.constant dense<0.000000e+00> : vector<2x256xf32>
    %164 = tpu.matmul %161, %6, %cst_45 {dimension_numbers = #tpu.dot_dimension_numbers<[1], [0], [0], [1], [0, 0, 1, 1], [], []>} : vector<2x64xf32>, vector<64x256xf32>, vector<2x256xf32> -> vector<2x256xf32>
    %165 = arith.addf %163, %164 : vector<2x256xf32>
    %166 = arith.negf %165 : vector<2x256xf32>
    %167 = math.exp %166 : vector<2x256xf32>
    %cst_46 = arith.constant 1.000000e+00 : f32
    %168 = vector.broadcast %cst_46 : f32 to vector<2x256xf32>
    %169 = arith.addf %168, %167 : vector<2x256xf32>
    %170 = arith.divf %168, %169 : vector<2x256xf32>
    %171 = vector.extract_strided_slice %170 {offsets = [0, 0], sizes = [2, 64], strides = [1, 1]} : vector<2x256xf32> to vector<2x64xf32>
    %172 = vector.extract_strided_slice %170 {offsets = [0, 64], sizes = [2, 64], strides = [1, 1]} : vector<2x256xf32> to vector<2x64xf32>
    %173 = vector.extract_strided_slice %170 {offsets = [0, 128], sizes = [2, 64], strides = [1, 1]} : vector<2x256xf32> to vector<2x64xf32>
    %cst_47 = arith.constant 2.000000e+00 : f32
    %174 = vector.broadcast %cst_47 : f32 to vector<2x64xf32>
    %175 = arith.mulf %174, %173 : vector<2x64xf32>
    %cst_48 = arith.constant 1.000000e+00 : f32
    %176 = vector.broadcast %cst_48 : f32 to vector<2x64xf32>
    %177 = arith.subf %175, %176 : vector<2x64xf32>
    %178 = vector.extract_strided_slice %170 {offsets = [0, 192], sizes = [2, 64], strides = [1, 1]} : vector<2x256xf32> to vector<2x64xf32>
    %179 = arith.mulf %172, %159 : vector<2x64xf32>
    %180 = arith.mulf %171, %177 : vector<2x64xf32>
    %181 = arith.addf %179, %180 : vector<2x64xf32>
    %182 = math.tanh %181 : vector<2x64xf32>
    %183 = arith.mulf %178, %182 : vector<2x64xf32>
    %c14 = arith.constant 14 : index
    %c0_49 = arith.constant 0 : index
    %184 = vector.load %arg7[%c14, %c0_49] : memref<16x64xf32, #tpu.memory_space<vmem>>, vector<2x64xf32>
    tpu.vector_store %arg7[%c14, %c0_49], %183 {strides = array<i32>} : memref<16x64xf32, #tpu.memory_space<vmem>>, vector<2x64xf32>,
    %c0_50 = arith.constant 0 : index
    %c0_51 = arith.constant 0 : index
    %185 = vector.load %arg7[%c0_50, %c0_51] : memref<16x64xf32, #tpu.memory_space<vmem>>, vector<16x64xf32>
    %c0_52 = arith.constant 0 : index
    %c0_53 = arith.constant 0 : index
    %186 = vector.load %arg4[%c0_52, %c0_53] : memref<64x128xf32, #tpu.memory_space<vmem>>, vector<64x128xf32>
    %cst_54 = arith.constant dense<0.000000e+00> : vector<16x128xf32>
    %187 = tpu.matmul %185, %186, %cst_54 {dimension_numbers = #tpu.dot_dimension_numbers<[1], [0], [0], [1], [0, 0, 1, 1], [], []>} : vector<16x64xf32>, vector<64x128xf32>, vector<16x128xf32> -> vector<16x128xf32>
    %c0_55 = arith.constant 0 : index
    %c0_56 = arith.constant 0 : index
    %188 = vector.load %arg5[%c0_55, %c0_56] : memref<1x128xf32, #tpu.memory_space<vmem>>, vector<1x128xf32>
    %189 = vector.broadcast %188 : vector<1x128xf32> to vector<16x128xf32>
    %190 = arith.addf %187, %189 : vector<16x128xf32>
    %c0_57 = arith.constant 0 : index
    %c0_58 = arith.constant 0 : index
    %191 = vector.load %arg6[%c0_57, %c0_58] : memref<16x128xf32, #tpu.memory_space<vmem>>, vector<16x128xf32>
    tpu.vector_store %arg6[%c0_57, %c0_58], %190 {strides = array<i32>} : memref<16x128xf32, #tpu.memory_space<vmem>>, vector<16x128xf32>,
    return
  }
}

</mosaic_0001>

<llo_original>
// kernel: tpu_custom_call.1
$region0: #{tpu_custom_call.1}
  #allocation0 [shape = 'u32[]', space=smem, size = 0x4, offset = 0x4, fixed_abs, tag = 'smem constant byte address 0x4 - core index']
  #allocation1 [shape = 'u32[144,128]{1,0:T(1,128)}', space=vmem, size = 0x12000, scoped, tag = 'internal scratch']
  #allocation2 [shape = 'f32[16,64]{1,0:T(8,128)}', space=vmem, size = 0x2000, scoped, tag = 'scratch operand']
  %s0 = inlined_call_operand.vmem [shape: f32[16,8], index: 0, kind: input, shape index: {}]
  %s1 = inlined_call_operand.vmem [shape: f32[8,256], index: 1, kind: input, shape index: {}]
  %s2 = inlined_call_operand.hbm [shape: f32[64,256], index: 2, kind: input, shape index: {}]
  %s3 = inlined_call_operand.vmem [shape: f32[1,256], index: 3, kind: input, shape index: {}]
  %s4 = inlined_call_operand.hbm [shape: f32[64,128], index: 4, kind: input, shape index: {}]
  %s5 = inlined_call_operand.vmem [shape: f32[1,128], index: 5, kind: input, shape index: {}]
  %s6 = inlined_call_operand.hbm [shape: f32[16,128], index: 6, kind: output, shape index: {}]
  %s7 = sld [smem:[#allocation0]]
  $region42: #{tpu_custom_call.1} parent=0
    _
  %s9 = ssub.s32 1, %s7
  %s10 = scalar_select 0, %s9, %s7
  $region1: #{tpu_custom_call.1} parent=0
    #allocation3 [shape = 'u8[65536]{0}', space=vmem, size = 0x10000, scoped, tag = 'input window, operand 2, single buffered']
    #allocation4 [shape = 's32[1]{0}', space=sflag, size = 0x4, scoped, tag = 'scoped memory for tpu_custom_call.1']
    #allocation5 [shape = 's32[1]{0}', space=sflag, size = 0x4, scoped, tag = 'scoped memory for tpu_custom_call.1']
    #allocation6 [shape = 'u8[32768]{0}', space=vmem, size = 0x8000, scoped, tag = 'input window, operand 4, single buffered']
    #allocation7 [shape = 's32[1]{0}', space=sflag, size = 0x4, scoped, tag = 'scoped memory for tpu_custom_call.1']
    #allocation8 [shape = 'u8[8192]{0}', space=vmem, size = 0x2000, scoped, tag = 'output window, operand 0, single buffered']
    %11 = vsyncpa [#allocation4], 0
    %12 = vsyncpa [#allocation7], 0
    %13 = vsyncpa [#allocation5], 0
    // Predicated region
    $region2: #{tpu_custom_call.1} parent=1 // pred_check
      _
    $region3: #{tpu_custom_call.1} parent=1 // pred_check_branch
      %15 = sbr.rel (0) target = $region5
    $region4: #{tpu_custom_call.1} parent=1 // pred_region
      _
    $region5: #{tpu_custom_call.1} parent=1 // pred_fallthru
      _
    // Predicated region
    $region6: #{tpu_custom_call.1} parent=1 // pred_check
      _
    $region7: #{tpu_custom_call.1} parent=1 // pred_check_branch
      %17 = sbr.rel (0) target = $region9
    $region8: #{tpu_custom_call.1} parent=1 // pred_region
      _
    $region9: #{tpu_custom_call.1} parent=1 // pred_fallthru
      _
    // Predicated region
    $region10: #{tpu_custom_call.1} parent=1 // pred_check
      _
    $region11: #{tpu_custom_call.1} parent=1 // pred_check_branch
      %19 = sbr.rel (0) target = $region13
    $region12: #{tpu_custom_call.1} parent=1 // pred_region
      %s21 = ssub.s32 2048, 2048
      %22 = vsyncadd [#allocation4], %s21
      %s23 = sshll.u32 [#allocation3], 4
      %s24 = int_to_ptr.vmem [resolvable:$true] %s23
      %29 = dma.hbm_to_vmem [thread:$0]  %s2, 2048, %s24, [#allocation4], 256, 256, 16
    $region13: #{tpu_custom_call.1} parent=1 // pred_fallthru
      _
    // Predicated region
    $region14: #{tpu_custom_call.1} parent=1 // pred_check
      _
    $region15: #{tpu_custom_call.1} parent=1 // pred_check_branch
      %31 = sbr.rel (0) target = $region17
    $region16: #{tpu_custom_call.1} parent=1 // pred_region
      _
    $region17: #{tpu_custom_call.1} parent=1 // pred_fallthru
      _
    // Predicated region
    $region18: #{tpu_custom_call.1} parent=1 // pred_check
      _
    $region19: #{tpu_custom_call.1} parent=1 // pred_check_branch
      %33 = sbr.rel (0) target = $region21
    $region20: #{tpu_custom_call.1} parent=1 // pred_region
      %s35 = ssub.s32 1024, 1024
      %36 = vsyncadd [#allocation7], %s35
      %s37 = sshll.u32 [#allocation6], 4
      %s38 = int_to_ptr.vmem [resolvable:$true] %s37
      %43 = dma.hbm_to_vmem [thread:$0]  %s4, 1024, %s38, [#allocation7], 128, 128, 8
    $region21: #{tpu_custom_call.1} parent=1 // pred_fallthru
      _
    // Predicated region
    $region22: #{tpu_custom_call.1} parent=1 // pred_check
      _
    $region23: #{tpu_custom_call.1} parent=1 // pred_check_branch
      %45 = sbr.rel (0) target = $region25
    $region24: #{tpu_custom_call.1} parent=1 // pred_region
      _
    $region25: #{tpu_custom_call.1} parent=1 // pred_fallthru
      _
    // Predicated region
    $region26: #{tpu_custom_call.1} parent=1 // pred_check
      _
    $region27: #{tpu_custom_call.1} parent=1 // pred_check_branch
      %47 = sbr.rel (0) target = $region29
    $region28: #{tpu_custom_call.1} parent=1 // pred_region
      %48 = dma.done [#allocation4], 2048
    $region29: #{tpu_custom_call.1} parent=1 // pred_fallthru
      _
    // Predicated region
    $region30: #{tpu_custom_call.1} parent=1 // pred_check
      _
    $region31: #{tpu_custom_call.1} parent=1 // pred_check_branch
      %50 = sbr.rel (0) target = $region33
    $region32: #{tpu_custom_call.1} parent=1 // pred_region
      %51 = dma.done [#allocation7], 1024
    $region33: #{tpu_custom_call.1} parent=1 // pred_fallthru
      _
    %v52 = vld [vmem:[%s0] sm:$0xff]
    %v53 = vld [vmem:[%s0 + $0x8] sm:$0xff]
    %v54 = vld [vmem:[%s1] sm:$0xff]
    %v55 = vld [vmem:[%s1 + $0x8] sm:$0xff]
    %v56 = vld [vmem:[%s3] sm:$0x3]
    %v58 = vlaneseq
    %v59 = vshrl.u32 %v58, 7
    %v60 = vsub.s32 0, %v59
    %v61 = vrot.slane %v56, %v60
    %v62 = vlaneseq
    %v63 = vshrl.u32 %v62, 7
    %v64 = vsub.s32 1, %v63
    %v65 = vrot.slane %v56, %v64
    %vm68 = vcmask 64512
    %v70 = vsel %vm68, %v52, 0
    %v73 = vsel %vm68, %v53, 0
    %75 = vmatprep.subr.mxu0 %v55
    %76 = vmatpush1.msra.mxu0 %v54
    %77 = vmatprep.subr.mxu0 0.0
    %78 = vmatpush1.msra.mxu0 0.0
    %79 = vmatprep.subr.mxu0 0.0
    %80 = vmatpush1.msra.mxu0 0.0
    %81 = vmatprep.subr.mxu0 0.0
    %82 = vmatpush1.msra.mxu0 0.0
    %83 = vmatprep.subr.mxu0 0.0
    %84 = vmatpush1.msra.mxu0 0.0
    %85 = vmatprep.subr.mxu0 0.0
    %86 = vmatpush1.msra.mxu0 0.0
    %87 = vmatprep.subr.mxu0 0.0
    %88 = vmatpush1.msra.mxu0 0.0
    %89 = vmatprep.subr.mxu0 0.0
    %90 = vmatpush1.msra.mxu0 0.0
    %91 = vmatprep.subr.mxu0 0.0
    %92 = vmatpush1.msra.mxu0 0.0
    %93 = vmatprep.subr.mxu0 0.0
    %94 = vmatpush1.msra.mxu0 0.0
    %95 = vmatprep.subr.mxu0 0.0
    %96 = vmatpush1.msra.mxu0 0.0
    %97 = vmatprep.subr.mxu0 0.0
    %98 = vmatpush1.msra.mxu0 0.0
    %99 = vmatprep.subr.mxu0 0.0
    %100 = vmatpush1.msra.mxu0 0.0
    %101 = vmatprep.subr.mxu0 0.0
    %102 = vmatpush1.msra.mxu0 0.0
    %103 = vmatprep.subr.mxu0 0.0
    %104 = vmatpush1.msra.mxu0 0.0
    %105 = vmatprep.subr.mxu0 0.0
    %106 = vmatpush1.msra.mxu0 0.0
    %107 = vmatprep.subr.mxu0 0.0
    %108 = vmatpush1.msra.mxu0 0.0
    %109 = vmatprep.subr.mxu0 0.0
    %110 = vmatpush1.msra.mxu0 0.0
    %111 = vmatprep.subr.mxu0 0.0
    %112 = vmatpush1.msra.mxu0 0.0
    %113 = vmatprep.subr.mxu0 0.0
    %114 = vmatpush1.msra.mxu0 0.0
    %115 = vmatprep.subr.mxu0 0.0
    %116 = vmatpush1.msra.mxu0 0.0
    %117 = vmatprep.subr.mxu0 0.0
    %118 = vmatpush1.msra.mxu0 0.0
    %119 = vmatprep.subr.mxu0 0.0
    %120 = vmatpush1.msra.mxu0 0.0
    %121 = vmatprep.subr.mxu0 0.0
    %122 = vmatpush1.msra.mxu0 0.0
    %123 = vmatprep.subr.mxu0 0.0
    %124 = vmatpush1.msra.mxu0 0.0
    %125 = vmatprep.subr.mxu0 0.0
    %126 = vmatpush1.msra.mxu0 0.0
    %127 = vmatprep.subr.mxu0 0.0
    %128 = vmatpush1.msra.mxu0 0.0
    %129 = vmatprep.subr.mxu0 0.0
    %130 = vmatpush1.msra.mxu0 0.0
    %131 = vmatprep.subr.mxu0 0.0
    %132 = vmatpush1.msra.mxu0 0.0
    %133 = vmatprep.subr.mxu0 0.0
    %134 = vmatpush1.msra.mxu0 0.0
    %135 = vmatprep.subr.mxu0 0.0
    %136 = vmatpush1.msra.mxu0 0.0
    %137 = vmatprep.subr.mxu0 0.0
    %138 = vmatpush1.msra.mxu0 0.0
    %139 = vmatprep.mubr.f32.mxu0 0.0
    %140 = vmatmul.mubr.f32.gmra.mrb[0].mxu0 %v70
    %v141 = vpop.f32.mrb[0].mxu0
    %v142 = vadd.f32 %v61, %v141
    %v143 = vpop.f32.mrb[0].mxu0
    %v144 = vadd.f32 %v65, %v143
    %145 = vmatprep.mubr.f32.mxu0 0.0
    %146 = vmatmul.mubr.f32.gmra.mrb[0].mxu0 %v73
    %v147 = vpop.f32.mrb[0].mxu0
    %v148 = vadd.f32 %v61, %v147
    %v149 = vpop.f32.mrb[0].mxu0
    %v150 = vadd.f32 %v65, %v149
    %151 = vdwg.mxu0
    %v152 = vld [vmem:[#allocation3] sm:$0xff]
    %v153 = vld [vmem:[#allocation3 + $0x8] sm:$0xff]
    %v154 = vld [vmem:[#allocation3 + $0x10] sm:$0xff]
    %v155 = vld [vmem:[#allocation3 + $0x18] sm:$0xff]
    %v156 = vld [vmem:[#allocation3 + $0x20] sm:$0xff]
    %v157 = vld [vmem:[#allocation3 + $0x28] sm:$0xff]
    %v158 = vld [vmem:[#allocation3 + $0x30] sm:$0xff]
    %v159 = vld [vmem:[#allocation3 + $0x38] sm:$0xff]
    %v160 = vld [vmem:[#allocation3 + $0x40] sm:$0xff]
    %v161 = vld [vmem:[#allocation3 + $0x48] sm:$0xff]
    %v162 = vld [vmem:[#allocation3 + $0x50] sm:$0xff]
    %v163 = vld [vmem:[#allocation3 + $0x58] sm:$0xff]
    %v164 = vld [vmem:[#allocation3 + $0x60] sm:$0xff]
    %v165 = vld [vmem:[#allocation3 + $0x68] sm:$0xff]
    %v166 = vld [vmem:[#allocation3 + $0x70] sm:$0xff]
    %v167 = vld [vmem:[#allocation3 + $0x78] sm:$0xff]
    %vm168 = vcmask 523264
    %v170 = vsel %vm168, 0.0, 0
    %172 = vmatprep.subr.mxu0 %v153
    %173 = vmatpush1.msra.mxu0 %v152
    %174 = vmatprep.subr.mxu0 %v155
    %175 = vmatpush1.msra.mxu0 %v154
    %176 = vmatprep.subr.mxu0 %v157
    %177 = vmatpush1.msra.mxu0 %v156
    %178 = vmatprep.subr.mxu0 %v159
    %179 = vmatpush1.msra.mxu0 %v158
    %180 = vmatprep.subr.mxu0 %v161
    %181 = vmatpush1.msra.mxu0 %v160
    %182 = vmatprep.subr.mxu0 %v163
    %183 = vmatpush1.msra.mxu0 %v162
    %184 = vmatprep.subr.mxu0 %v165
    %185 = vmatpush1.msra.mxu0 %v164
    %186 = vmatprep.subr.mxu0 %v167
    %187 = vmatpush1.msra.mxu0 %v166
    %188 = vmatprep.subr.mxu0 0.0
    %189 = vmatpush1.msra.mxu0 0.0
    %190 = vmatprep.subr.mxu0 0.0
    %191 = vmatpush1.msra.mxu0 0.0
    %192 = vmatprep.subr.mxu0 0.0
    %193 = vmatpush1.msra.mxu0 0.0
    %194 = vmatprep.subr.mxu0 0.0
    %195 = vmatpush1.msra.mxu0 0.0
    %196 = vmatprep.subr.mxu0 0.0
    %197 = vmatpush1.msra.mxu0 0.0
    %198 = vmatprep.subr.mxu0 0.0
    %199 = vmatpush1.msra.mxu0 0.0
    %200 = vmatprep.subr.mxu0 0.0
    %201 = vmatpush1.msra.mxu0 0.0
    %202 = vmatprep.subr.mxu0 0.0
    %203 = vmatpush1.msra.mxu0 0.0
    %204 = vmatprep.subr.mxu0 0.0
    %205 = vmatpush1.msra.mxu0 0.0
    %206 = vmatprep.subr.mxu0 0.0
    %207 = vmatpush1.msra.mxu0 0.0
    %208 = vmatprep.subr.mxu0 0.0
    %209 = vmatpush1.msra.mxu0 0.0
    %210 = vmatprep.subr.mxu0 0.0
    %211 = vmatpush1.msra.mxu0 0.0
    %212 = vmatprep.subr.mxu0 0.0
    %213 = vmatpush1.msra.mxu0 0.0
    %214 = vmatprep.subr.mxu0 0.0
    %215 = vmatpush1.msra.mxu0 0.0
    %216 = vmatprep.subr.mxu0 0.0
    %217 = vmatpush1.msra.mxu0 0.0
    %218 = vmatprep.subr.mxu0 0.0
    %219 = vmatpush1.msra.mxu0 0.0
    %220 = vmatprep.subr.mxu0 0.0
    %221 = vmatpush1.msra.mxu0 0.0
    %222 = vmatprep.subr.mxu0 0.0
    %223 = vmatpush1.msra.mxu0 0.0
    %224 = vmatprep.subr.mxu0 0.0
    %225 = vmatpush1.msra.mxu0 0.0
    %226 = vmatprep.subr.mxu0 0.0
    %227 = vmatpush1.msra.mxu0 0.0
    %228 = vmatprep.subr.mxu0 0.0
    %229 = vmatpush1.msra.mxu0 0.0
    %230 = vmatprep.subr.mxu0 0.0
    %231 = vmatpush1.msra.mxu0 0.0
    %232 = vmatprep.subr.mxu0 0.0
    %233 = vmatpush1.msra.mxu0 0.0
    %234 = vmatprep.subr.mxu0 0.0
    %235 = vmatpush1.msra.mxu0 0.0
    %236 = vmatprep.mubr.f32.mxu0 0.0
    %237 = vmatmul.mubr.f32.gmra.mrb[0].mxu0 %v170
    %v238 = vpop.f32.mrb[0].mxu0
    %v239 = vadd.f32 0.0, %v238
    %v240 = vpop.f32.mrb[0].mxu0
    %v241 = vadd.f32 0.0, %v240
    %242 = vdwg.mxu0
    %v243 = vadd.f32 %v142, %v239
    %v244 = vadd.f32 %v144, %v241
    %v245 = vxor.u32 %v243, 2147483648
    %v246 = vxor.u32 %v244, 2147483648
    %v247 = vmul.f32 %v245, 1.442695
    %v248 = vpow.pop %v247
    %v249 = vmul.f32 %v246, 1.442695
    %v250 = vpow.pop %v249
    %v251 = vadd.f32 %v248, 1.0
    %v252 = vadd.f32 %v250, 1.0
    %v253 = vrcp.pop %v251
    %v254 = vmul.f32 1.0, %v253
    %v255 = vrcp.pop %v252
    %v256 = vmul.f32 1.0, %v255
    %v257 = vmul.f32 %v256, 2.0
    %v258 = vsub.f32 %v257, 1.0
    %v259 = vmul.f32 %v254, 0.0
    %v260 = vmul.f32 %v254, %v258
    %262 = vrot.lane.b32.xlu0 %v260, 64
    %v263 = vpop.permute.xlu0 %262
    %v265 = vadd.f32 %v259, %v263
    %v266 = vtanh.pop %v265
    %v267 = vmul.f32 %v256, %v266
    %269 = vrot.lane.b32.xlu0 %v267, 64
    %v270 = vpop.permute.xlu0 %269
    %vm272 = vcmask 517120
    %273 = vst.msk [vmem:[#allocation2] sm:$0x3] %vm272, %v270
    %v274 = vsel %vm168, %v270, 0
    %276 = vmatprep.subr.mxu0 %v153
    %277 = vmatpush1.msra.mxu0 %v152
    %278 = vmatprep.subr.mxu0 %v155
    %279 = vmatpush1.msra.mxu0 %v154
    %280 = vmatprep.subr.mxu0 %v157
    %281 = vmatpush1.msra.mxu0 %v156
    %282 = vmatprep.subr.mxu0 %v159
    %283 = vmatpush1.msra.mxu0 %v158
    %284 = vmatprep.subr.mxu0 %v161
    %285 = vmatpush1.msra.mxu0 %v160
    %286 = vmatprep.subr.mxu0 %v163
    %287 = vmatpush1.msra.mxu0 %v162
    %288 = vmatprep.subr.mxu0 %v165
    %289 = vmatpush1.msra.mxu0 %v164
    %290 = vmatprep.subr.mxu0 %v167
    %291 = vmatpush1.msra.mxu0 %v166
    %292 = vmatprep.subr.mxu0 0.0
    %293 = vmatpush1.msra.mxu0 0.0
    %294 = vmatprep.subr.mxu0 0.0
    %295 = vmatpush1.msra.mxu0 0.0
    %296 = vmatprep.subr.mxu0 0.0
    %297 = vmatpush1.msra.mxu0 0.0
    %298 = vmatprep.subr.mxu0 0.0
    %299 = vmatpush1.msra.mxu0 0.0
    %300 = vmatprep.subr.mxu0 0.0
    %301 = vmatpush1.msra.mxu0 0.0
    %302 = vmatprep.subr.mxu0 0.0
    %303 = vmatpush1.msra.mxu0 0.0
    %304 = vmatprep.subr.mxu0 0.0
    %305 = vmatpush1.msra.mxu0 0.0
    %306 = vmatprep.subr.mxu0 0.0
    %307 = vmatpush1.msra.mxu0 0.0
    %308 = vmatprep.subr.mxu0 0.0
    %309 = vmatpush1.msra.mxu0 0.0
    %310 = vmatprep.subr.mxu0 0.0
    %311 = vmatpush1.msra.mxu0 0.0
    %312 = vmatprep.subr.mxu0 0.0
    %313 = vmatpush1.msra.mxu0 0.0
    %314 = vmatprep.subr.mxu0 0.0
    %315 = vmatpush1.msra.mxu0 0.0
    %316 = vmatprep.subr.mxu0 0.0
    %317 = vmatpush1.msra.mxu0 0.0
    %318 = vmatprep.subr.mxu0 0.0
    %319 = vmatpush1.msra.mxu0 0.0
    %320 = vmatprep.subr.mxu0 0.0
    %321 = vmatpush1.msra.mxu0 0.0
    %322 = vmatprep.subr.mxu0 0.0
    %323 = vmatpush1.msra.mxu0 0.0
    %324 = vmatprep.subr.mxu0 0.0
    %325 = vmatpush1.msra.mxu0 0.0
    %326 = vmatprep.subr.mxu0 0.0
    %327 = vmatpush1.msra.mxu0 0.0
    %328 = vmatprep.subr.mxu0 0.0
    %329 = vmatpush1.msra.mxu0 0.0
    %330 = vmatprep.subr.mxu0 0.0
    %331 = vmatpush1.msra.mxu0 0.0
    %332 = vmatprep.subr.mxu0 0.0
    %333 = vmatpush1.msra.mxu0 0.0
    %334 = vmatprep.subr.mxu0 0.0
    %335 = vmatpush1.msra.mxu0 0.0
    %336 = vmatprep.subr.mxu0 0.0
    %337 = vmatpush1.msra.mxu0 0.0
    %338 = vmatprep.subr.mxu0 0.0
    %339 = vmatpush1.msra.mxu0 0.0
    %340 = vmatprep.mubr.f32.mxu0 0.0
    %341 = vmatmul.mubr.f32.gmra.mrb[0].mxu0 %v274
    %v342 = vpop.f32.mrb[0].mxu0
    %v343 = vadd.f32 0.0, %v342
    %v344 = vpop.f32.mrb[0].mxu0
    %v345 = vadd.f32 0.0, %v344
    %346 = vdwg.mxu0
    %v349 = vrot.slane %v343, 6
    %v350 = vrot.slane %v345, 6
    %v353 = vadd.f32 %v142, %v349
    %v354 = vadd.f32 %v144, %v350
    %v355 = vxor.u32 %v353, 2147483648
    %v356 = vxor.u32 %v354, 2147483648
    %v357 = vmul.f32 %v355, 1.442695
    %v358 = vpow.pop %v357
    %v359 = vmul.f32 %v356, 1.442695
    %v360 = vpow.pop %v359
    %v361 = vadd.f32 %v358, 1.0
    %v362 = vadd.f32 %v360, 1.0
    %v363 = vrcp.pop %v361
    %v364 = vmul.f32 1.0, %v363
    %v365 = vrcp.pop %v362
    %v366 = vmul.f32 1.0, %v365
    %v367 = vmul.f32 %v366, 2.0
    %v368 = vsub.f32 %v367, 1.0
    %v370 = vrot.slane %v265, 6
    %v372 = vmul.f32 %v364, %v370
    %v373 = vmul.f32 %v364, %v368
    %375 = vrot.lane.b32.xlu0 %v373, 64
    %v376 = vpop.permute.xlu0 %375
    %v378 = vadd.f32 %v372, %v376
    %v379 = vtanh.pop %v378
    %v380 = vmul.f32 %v366, %v379
    %382 = vrot.lane.b32.xlu0 %v380, 64
    %v383 = vpop.permute.xlu0 %382
    %vm385 = vcmask 519170
    %386 = vst.msk [vmem:[#allocation2] sm:$0xc] %vm385, %v383
    %v387 = vrot.slane %v380, 2
    %388 = vrot.lane.b32.xlu0 %v387, 64
    %v389 = vpop.permute.xlu0 %388
    %v390 = vsel %vm168, %v389, 0
    %392 = vmatprep.subr.mxu0 %v153
    %393 = vmatpush1.msra.mxu0 %v152
    %394 = vmatprep.subr.mxu0 %v155
    %395 = vmatpush1.msra.mxu0 %v154
    %396 = vmatprep.subr.mxu0 %v157
    %397 = vmatpush1.msra.mxu0 %v156
    %398 = vmatprep.subr.mxu0 %v159
    %399 = vmatpush1.msra.mxu0 %v158
    %400 = vmatprep.subr.mxu0 %v161
    %401 = vmatpush1.msra.mxu0 %v160
    %402 = vmatprep.subr.mxu0 %v163
    %403 = vmatpush1.msra.mxu0 %v162
    %404 = vmatprep.subr.mxu0 %v165
    %405 = vmatpush1.msra.mxu0 %v164
    %406 = vmatprep.subr.mxu0 %v167
    %407 = vmatpush1.msra.mxu0 %v166
    %408 = vmatprep.subr.mxu0 0.0
    %409 = vmatpush1.msra.mxu0 0.0
    %410 = vmatprep.subr.mxu0 0.0
    %411 = vmatpush1.msra.mxu0 0.0
    %412 = vmatprep.subr.mxu0 0.0
    %413 = vmatpush1.msra.mxu0 0.0
    %414 = vmatprep.subr.mxu0 0.0
    %415 = vmatpush1.msra.mxu0 0.0
    %416 = vmatprep.subr.mxu0 0.0
    %417 = vmatpush1.msra.mxu0 0.0
    %418 = vmatprep.subr.mxu0 0.0
    %419 = vmatpush1.msra.mxu0 0.0
    %420 = vmatprep.subr.mxu0 0.0
    %421 = vmatpush1.msra.mxu0 0.0
    %422 = vmatprep.subr.mxu0 0.0
    %423 = vmatpush1.msra.mxu0 0.0
    %424 = vmatprep.subr.mxu0 0.0
    %425 = vmatpush1.msra.mxu0 0.0
    %426 = vmatprep.subr.mxu0 0.0
    %427 = vmatpush1.msra.mxu0 0.0
    %428 = vmatprep.subr.mxu0 0.0
    %429 = vmatpush1.msra.mxu0 0.0
    %430 = vmatprep.subr.mxu0 0.0
    %431 = vmatpush1.msra.mxu0 0.0
    %432 = vmatprep.subr.mxu0 0.0
    %433 = vmatpush1.msra.mxu0 0.0
    %434 = vmatprep.subr.mxu0 0.0
    %435 = vmatpush1.msra.mxu0 0.0
    %436 = vmatprep.subr.mxu0 0.0
    %437 = vmatpush1.msra.mxu0 0.0
    %438 = vmatprep.subr.mxu0 0.0
    %439 = vmatpush1.msra.mxu0 0.0
    %440 = vmatprep.subr.mxu0 0.0
    %441 = vmatpush1.msra.mxu0 0.0
    %442 = vmatprep.subr.mxu0 0.0
    %443 = vmatpush1.msra.mxu0 0.0
    %444 = vmatprep.subr.mxu0 0.0
    %445 = vmatpush1.msra.mxu0 0.0
    %446 = vmatprep.subr.mxu0 0.0
    %447 = vmatpush1.msra.mxu0 0.0
    %448 = vmatprep.subr.mxu0 0.0
    %449 = vmatpush1.msra.mxu0 0.0
    %450 = vmatprep.subr.mxu0 0.0
    %451 = vmatpush1.msra.mxu0 0.0
    %452 = vmatprep.subr.mxu0 0.0
    %453 = vmatpush1.msra.mxu0 0.0
    %454 = vmatprep.subr.mxu0 0.0
    %455 = vmatpush1.msra.mxu0 0.0
    %456 = vmatprep.mubr.f32.mxu0 0.0
    %457 = vmatmul.mubr.f32.gmra.mrb[0].mxu0 %v390
    %v458 = vpop.f32.mrb[0].mxu0
    %v459 = vadd.f32 0.0, %v458
    %v460 = vpop.f32.mrb[0].mxu0
    %v461 = vadd.f32 0.0, %v460
    %462 = vdwg.mxu0
    %v465 = vrot.slane %v459, 4
    %v466 = vrot.slane %v461, 4
    %v469 = vadd.f32 %v142, %v465
    %v470 = vadd.f32 %v144, %v466
    %v471 = vxor.u32 %v469, 2147483648
    %v472 = vxor.u32 %v470, 2147483648
    %v473 = vmul.f32 %v471, 1.442695
    %v474 = vpow.pop %v473
    %v475 = vmul.f32 %v472, 1.442695
    %v476 = vpow.pop %v475
    %v477 = vadd.f32 %v474, 1.0
    %v478 = vadd.f32 %v476, 1.0
    %v479 = vrcp.pop %v477
    %v480 = vmul.f32 1.0, %v479
    %v481 = vrcp.pop %v478
    %v482 = vmul.f32 1.0, %v481
    %v483 = vmul.f32 %v482, 2.0
    %v484 = vsub.f32 %v483, 1.0
    %v486 = vrot.slane %v378, 6
    %v488 = vmul.f32 %v480, %v486
    %v489 = vmul.f32 %v480, %v484
    %491 = vrot.lane.b32.xlu0 %v489, 64
    %v492 = vpop.permute.xlu0 %491
    %v494 = vadd.f32 %v488, %v492
    %v495 = vtanh.pop %v494
    %v496 = vmul.f32 %v482, %v495
    %498 = vrot.lane.b32.xlu0 %v496, 64
    %v499 = vpop.permute.xlu0 %498
    %vm501 = vcmask 521220
    %502 = vst.msk [vmem:[#allocation2] sm:$0x30] %vm501, %v499
    %v503 = vrot.slane %v496, 4
    %504 = vrot.lane.b32.xlu0 %v503, 64
    %v505 = vpop.permute.xlu0 %504
    %v506 = vsel %vm168, %v505, 0
    %508 = vmatprep.subr.mxu0 %v153
    %509 = vmatpush1.msra.mxu0 %v152
    %510 = vmatprep.subr.mxu0 %v155
    %511 = vmatpush1.msra.mxu0 %v154
    %512 = vmatprep.subr.mxu0 %v157
    %513 = vmatpush1.msra.mxu0 %v156
    %514 = vmatprep.subr.mxu0 %v159
    %515 = vmatpush1.msra.mxu0 %v158
    %516 = vmatprep.subr.mxu0 %v161
    %517 = vmatpush1.msra.mxu0 %v160
    %518 = vmatprep.subr.mxu0 %v163
    %519 = vmatpush1.msra.mxu0 %v162
    %520 = vmatprep.subr.mxu0 %v165
    %521 = vmatpush1.msra.mxu0 %v164
    %522 = vmatprep.subr.mxu0 %v167
    %523 = vmatpush1.msra.mxu0 %v166
    %524 = vmatprep.subr.mxu0 0.0
    %525 = vmatpush1.msra.mxu0 0.0
    %526 = vmatprep.subr.mxu0 0.0
    %527 = vmatpush1.msra.mxu0 0.0
    %528 = vmatprep.subr.mxu0 0.0
    %529 = vmatpush1.msra.mxu0 0.0
    %530 = vmatprep.subr.mxu0 0.0
    %531 = vmatpush1.msra.mxu0 0.0
    %532 = vmatprep.subr.mxu0 0.0
    %533 = vmatpush1.msra.mxu0 0.0
    %534 = vmatprep.subr.mxu0 0.0
    %535 = vmatpush1.msra.mxu0 0.0
    %536 = vmatprep.subr.mxu0 0.0
    %537 = vmatpush1.msra.mxu0 0.0
    %538 = vmatprep.subr.mxu0 0.0
    %539 = vmatpush1.msra.mxu0 0.0
    %540 = vmatprep.subr.mxu0 0.0
    %541 = vmatpush1.msra.mxu0 0.0
    %542 = vmatprep.subr.mxu0 0.0
    %543 = vmatpush1.msra.mxu0 0.0
    %544 = vmatprep.subr.mxu0 0.0
    %545 = vmatpush1.msra.mxu0 0.0
    %546 = vmatprep.subr.mxu0 0.0
    %547 = vmatpush1.msra.mxu0 0.0
    %548 = vmatprep.subr.mxu0 0.0
    %549 = vmatpush1.msra.mxu0 0.0
    %550 = vmatprep.subr.mxu0 0.0
    %551 = vmatpush1.msra.mxu0 0.0
    %552 = vmatprep.subr.mxu0 0.0
    %553 = vmatpush1.msra.mxu0 0.0
    %554 = vmatprep.subr.mxu0 0.0
    %555 = vmatpush1.msra.mxu0 0.0
    %556 = vmatprep.subr.mxu0 0.0
    %557 = vmatpush1.msra.mxu0 0.0
    %558 = vmatprep.subr.mxu0 0.0
    %559 = vmatpush1.msra.mxu0 0.0
    %560 = vmatprep.subr.mxu0 0.0
    %561 = vmatpush1.msra.mxu0 0.0
    %562 = vmatprep.subr.mxu0 0.0
    %563 = vmatpush1.msra.mxu0 0.0
    %564 = vmatprep.subr.mxu0 0.0
    %565 = vmatpush1.msra.mxu0 0.0
    %566 = vmatprep.subr.mxu0 0.0
    %567 = vmatpush1.msra.mxu0 0.0
    %568 = vmatprep.subr.mxu0 0.0
    %569 = vmatpush1.msra.mxu0 0.0
    %570 = vmatprep.subr.mxu0 0.0
    %571 = vmatpush1.msra.mxu0 0.0
    %572 = vmatprep.mubr.f32.mxu0 0.0
    %573 = vmatmul.mubr.f32.gmra.mrb[0].mxu0 %v506
    %v574 = vpop.f32.mrb[0].mxu0
    %v575 = vadd.f32 0.0, %v574
    %v576 = vpop.f32.mrb[0].mxu0
    %v577 = vadd.f32 0.0, %v576
    %578 = vdwg.mxu0
    %v581 = vrot.slane %v575, 2
    %v582 = vrot.slane %v577, 2
    %v585 = vadd.f32 %v142, %v581
    %v586 = vadd.f32 %v144, %v582
    %v587 = vxor.u32 %v585, 2147483648
    %v588 = vxor.u32 %v586, 2147483648
    %v589 = vmul.f32 %v587, 1.442695
    %v590 = vpow.pop %v589
    %v591 = vmul.f32 %v588, 1.442695
    %v592 = vpow.pop %v591
    %v593 = vadd.f32 %v590, 1.0
    %v594 = vadd.f32 %v592, 1.0
    %v595 = vrcp.pop %v593
    %v596 = vmul.f32 1.0, %v595
    %v597 = vrcp.pop %v594
    %v598 = vmul.f32 1.0, %v597
    %v599 = vmul.f32 %v598, 2.0
    %v600 = vsub.f32 %v599, 1.0
    %v602 = vrot.slane %v494, 6
    %v604 = vmul.f32 %v596, %v602
    %v605 = vmul.f32 %v596, %v600
    %607 = vrot.lane.b32.xlu0 %v605, 64
    %v608 = vpop.permute.xlu0 %607
    %v610 = vadd.f32 %v604, %v608
    %v611 = vtanh.pop %v610
    %v612 = vmul.f32 %v598, %v611
    %614 = vrot.lane.b32.xlu0 %v612, 64
    %v615 = vpop.permute.xlu0 %614
    %vm617 = vcmask 523270
    %618 = vst.msk [vmem:[#allocation2] sm:$0xc0] %vm617, %v615
    %v619 = vrot.slane %v612, 6
    %620 = vrot.lane.b32.xlu0 %v619, 64
    %v621 = vpop.permute.xlu0 %620
    %v622 = vsel %vm168, %v621, 0
    %624 = vmatprep.subr.mxu0 %v153
    %625 = vmatpush1.msra.mxu0 %v152
    %626 = vmatprep.subr.mxu0 %v155
    %627 = vmatpush1.msra.mxu0 %v154
    %628 = vmatprep.subr.mxu0 %v157
    %629 = vmatpush1.msra.mxu0 %v156
    %630 = vmatprep.subr.mxu0 %v159
    %631 = vmatpush1.msra.mxu0 %v158
    %632 = vmatprep.subr.mxu0 %v161
    %633 = vmatpush1.msra.mxu0 %v160
    %634 = vmatprep.subr.mxu0 %v163
    %635 = vmatpush1.msra.mxu0 %v162
    %636 = vmatprep.subr.mxu0 %v165
    %637 = vmatpush1.msra.mxu0 %v164
    %638 = vmatprep.subr.mxu0 %v167
    %639 = vmatpush1.msra.mxu0 %v166
    %640 = vmatprep.subr.mxu0 0.0
    %641 = vmatpush1.msra.mxu0 0.0
    %642 = vmatprep.subr.mxu0 0.0
    %643 = vmatpush1.msra.mxu0 0.0
    %644 = vmatprep.subr.mxu0 0.0
    %645 = vmatpush1.msra.mxu0 0.0
    %646 = vmatprep.subr.mxu0 0.0
    %647 = vmatpush1.msra.mxu0 0.0
    %648 = vmatprep.subr.mxu0 0.0
    %649 = vmatpush1.msra.mxu0 0.0
    %650 = vmatprep.subr.mxu0 0.0
    %651 = vmatpush1.msra.mxu0 0.0
    %652 = vmatprep.subr.mxu0 0.0
    %653 = vmatpush1.msra.mxu0 0.0
    %654 = vmatprep.subr.mxu0 0.0
    %655 = vmatpush1.msra.mxu0 0.0
    %656 = vmatprep.subr.mxu0 0.0
    %657 = vmatpush1.msra.mxu0 0.0
    %658 = vmatprep.subr.mxu0 0.0
    %659 = vmatpush1.msra.mxu0 0.0
    %660 = vmatprep.subr.mxu0 0.0
    %661 = vmatpush1.msra.mxu0 0.0
    %662 = vmatprep.subr.mxu0 0.0
    %663 = vmatpush1.msra.mxu0 0.0
    %664 = vmatprep.subr.mxu0 0.0
    %665 = vmatpush1.msra.mxu0 0.0
    %666 = vmatprep.subr.mxu0 0.0
    %667 = vmatpush1.msra.mxu0 0.0
    %668 = vmatprep.subr.mxu0 0.0
    %669 = vmatpush1.msra.mxu0 0.0
    %670 = vmatprep.subr.mxu0 0.0
    %671 = vmatpush1.msra.mxu0 0.0
    %672 = vmatprep.subr.mxu0 0.0
    %673 = vmatpush1.msra.mxu0 0.0
    %674 = vmatprep.subr.mxu0 0.0
    %675 = vmatpush1.msra.mxu0 0.0
    %676 = vmatprep.subr.mxu0 0.0
    %677 = vmatpush1.msra.mxu0 0.0
    %678 = vmatprep.subr.mxu0 0.0
    %679 = vmatpush1.msra.mxu0 0.0
    %680 = vmatprep.subr.mxu0 0.0
    %681 = vmatpush1.msra.mxu0 0.0
    %682 = vmatprep.subr.mxu0 0.0
    %683 = vmatpush1.msra.mxu0 0.0
    %684 = vmatprep.subr.mxu0 0.0
    %685 = vmatpush1.msra.mxu0 0.0
    %686 = vmatprep.subr.mxu0 0.0
    %687 = vmatpush1.msra.mxu0 0.0
    %688 = vmatprep.mubr.f32.mxu0 0.0
    %689 = vmatmul.mubr.f32.gmra.mrb[0].mxu0 %v622
    %v690 = vpop.f32.mrb[0].mxu0
    %v691 = vadd.f32 0.0, %v690
    %v692 = vpop.f32.mrb[0].mxu0
    %v693 = vadd.f32 0.0, %v692
    %694 = vdwg.mxu0
    %v695 = vadd.f32 %v148, %v691
    %v696 = vadd.f32 %v150, %v693
    %v697 = vxor.u32 %v695, 2147483648
    %v698 = vxor.u32 %v696, 2147483648
    %v699 = vmul.f32 %v697, 1.442695
    %v700 = vpow.pop %v699
    %v701 = vmul.f32 %v698, 1.442695
    %v702 = vpow.pop %v701
    %v703 = vadd.f32 %v700, 1.0
    %v704 = vadd.f32 %v702, 1.0
    %v705 = vrcp.pop %v703
    %v706 = vmul.f32 1.0, %v705
    %v707 = vrcp.pop %v704
    %v708 = vmul.f32 1.0, %v707
    %v709 = vmul.f32 %v708, 2.0
    %v710 = vsub.f32 %v709, 1.0
    %v712 = vrot.slane %v610, 6
    %v714 = vmul.f32 %v706, %v712
    %v715 = vmul.f32 %v706, %v710
    %717 = vrot.lane.b32.xlu0 %v715, 64
    %v718 = vpop.permute.xlu0 %717
    %v720 = vadd.f32 %v714, %v718
    %v721 = vtanh.pop %v720
    %v722 = vmul.f32 %v708, %v721
    %724 = vrot.lane.b32.xlu0 %v722, 64
    %v725 = vpop.permute.xlu0 %724
    %727 = vst.msk [vmem:[#allocation2 + $0x8] sm:$0x3] %vm272, %v725
    %v728 = vsel %vm168, %v725, 0
    %730 = vmatprep.subr.mxu0 %v153
    %731 = vmatpush1.msra.mxu0 %v152
    %732 = vmatprep.subr.mxu0 %v155
    %733 = vmatpush1.msra.mxu0 %v154
    %734 = vmatprep.subr.mxu0 %v157
    %735 = vmatpush1.msra.mxu0 %v156
    %736 = vmatprep.subr.mxu0 %v159
    %737 = vmatpush1.msra.mxu0 %v158
    %738 = vmatprep.subr.mxu0 %v161
    %739 = vmatpush1.msra.mxu0 %v160
    %740 = vmatprep.subr.mxu0 %v163
    %741 = vmatpush1.msra.mxu0 %v162
    %742 = vmatprep.subr.mxu0 %v165
    %743 = vmatpush1.msra.mxu0 %v164
    %744 = vmatprep.subr.mxu0 %v167
    %745 = vmatpush1.msra.mxu0 %v166
    %746 = vmatprep.subr.mxu0 0.0
    %747 = vmatpush1.msra.mxu0 0.0
    %748 = vmatprep.subr.mxu0 0.0
    %749 = vmatpush1.msra.mxu0 0.0
    %750 = vmatprep.subr.mxu0 0.0
    %751 = vmatpush1.msra.mxu0 0.0
    %752 = vmatprep.subr.mxu0 0.0
    %753 = vmatpush1.msra.mxu0 0.0
    %754 = vmatprep.subr.mxu0 0.0
    %755 = vmatpush1.msra.mxu0 0.0
    %756 = vmatprep.subr.mxu0 0.0
    %757 = vmatpush1.msra.mxu0 0.0
    %758 = vmatprep.subr.mxu0 0.0
    %759 = vmatpush1.msra.mxu0 0.0
    %760 = vmatprep.subr.mxu0 0.0
    %761 = vmatpush1.msra.mxu0 0.0
    %762 = vmatprep.subr.mxu0 0.0
    %763 = vmatpush1.msra.mxu0 0.0
    %764 = vmatprep.subr.mxu0 0.0
    %765 = vmatpush1.msra.mxu0 0.0
    %766 = vmatprep.subr.mxu0 0.0
    %767 = vmatpush1.msra.mxu0 0.0
    %768 = vmatprep.subr.mxu0 0.0
    %769 = vmatpush1.msra.mxu0 0.0
    %770 = vmatprep.subr.mxu0 0.0
    %771 = vmatpush1.msra.mxu0 0.0
    %772 = vmatprep.subr.mxu0 0.0
    %773 = vmatpush1.msra.mxu0 0.0
    %774 = vmatprep.subr.mxu0 0.0
    %775 = vmatpush1.msra.mxu0 0.0
    %776 = vmatprep.subr.mxu0 0.0
    %777 = vmatpush1.msra.mxu0 0.0
    %778 = vmatprep.subr.mxu0 0.0
    %779 = vmatpush1.msra.mxu0 0.0
    %780 = vmatprep.subr.mxu0 0.0
    %781 = vmatpush1.msra.mxu0 0.0
    %782 = vmatprep.subr.mxu0 0.0
    %783 = vmatpush1.msra.mxu0 0.0
    %784 = vmatprep.subr.mxu0 0.0
    %785 = vmatpush1.msra.mxu0 0.0
    %786 = vmatprep.subr.mxu0 0.0
    %787 = vmatpush1.msra.mxu0 0.0
    %788 = vmatprep.subr.mxu0 0.0
    %789 = vmatpush1.msra.mxu0 0.0
    %790 = vmatprep.subr.mxu0 0.0
    %791 = vmatpush1.msra.mxu0 0.0
    %792 = vmatprep.subr.mxu0 0.0
    %793 = vmatpush1.msra.mxu0 0.0
    %794 = vmatprep.mubr.f32.mxu0 0.0
    %795 = vmatmul.mubr.f32.gmra.mrb[0].mxu0 %v728
    %v796 = vpop.f32.mrb[0].mxu0
    %v797 = vadd.f32 0.0, %v796
    %v798 = vpop.f32.mrb[0].mxu0
    %v799 = vadd.f32 0.0, %v798
    %800 = vdwg.mxu0
    %v803 = vrot.slane %v797, 6
    %v804 = vrot.slane %v799, 6
    %v807 = vadd.f32 %v148, %v803
    %v808 = vadd.f32 %v150, %v804
    %v809 = vxor.u32 %v807, 2147483648
    %v810 = vxor.u32 %v808, 2147483648
    %v811 = vmul.f32 %v809, 1.442695
    %v812 = vpow.pop %v811
    %v813 = vmul.f32 %v810, 1.442695
    %v814 = vpow.pop %v813
    %v815 = vadd.f32 %v812, 1.0
    %v816 = vadd.f32 %v814, 1.0
    %v817 = vrcp.pop %v815
    %v818 = vmul.f32 1.0, %v817
    %v819 = vrcp.pop %v816
    %v820 = vmul.f32 1.0, %v819
    %v821 = vmul.f32 %v820, 2.0
    %v822 = vsub.f32 %v821, 1.0
    %v824 = vrot.slane %v720, 6
    %v826 = vmul.f32 %v818, %v824
    %v827 = vmul.f32 %v818, %v822
    %829 = vrot.lane.b32.xlu0 %v827, 64
    %v830 = vpop.permute.xlu0 %829
    %v832 = vadd.f32 %v826, %v830
    %v833 = vtanh.pop %v832
    %v834 = vmul.f32 %v820, %v833
    %836 = vrot.lane.b32.xlu0 %v834, 64
    %v837 = vpop.permute.xlu0 %836
    %839 = vst.msk [vmem:[#allocation2 + $0x8] sm:$0xc] %vm385, %v837
    %v840 = vrot.slane %v834, 2
    %841 = vrot.lane.b32.xlu0 %v840, 64
    %v842 = vpop.permute.xlu0 %841
    %v843 = vsel %vm168, %v842, 0
    %845 = vmatprep.subr.mxu0 %v153
    %846 = vmatpush1.msra.mxu0 %v152
    %847 = vmatprep.subr.mxu0 %v155
    %848 = vmatpush1.msra.mxu0 %v154
    %849 = vmatprep.subr.mxu0 %v157
    %850 = vmatpush1.msra.mxu0 %v156
    %851 = vmatprep.subr.mxu0 %v159
    %852 = vmatpush1.msra.mxu0 %v158
    %853 = vmatprep.subr.mxu0 %v161
    %854 = vmatpush1.msra.mxu0 %v160
    %855 = vmatprep.subr.mxu0 %v163
    %856 = vmatpush1.msra.mxu0 %v162
    %857 = vmatprep.subr.mxu0 %v165
    %858 = vmatpush1.msra.mxu0 %v164
    %859 = vmatprep.subr.mxu0 %v167
    %860 = vmatpush1.msra.mxu0 %v166
    %861 = vmatprep.subr.mxu0 0.0
    %862 = vmatpush1.msra.mxu0 0.0
    %863 = vmatprep.subr.mxu0 0.0
    %864 = vmatpush1.msra.mxu0 0.0
    %865 = vmatprep.subr.mxu0 0.0
    %866 = vmatpush1.msra.mxu0 0.0
    %867 = vmatprep.subr.mxu0 0.0
    %868 = vmatpush1.msra.mxu0 0.0
    %869 = vmatprep.subr.mxu0 0.0
    %870 = vmatpush1.msra.mxu0 0.0
    %871 = vmatprep.subr.mxu0 0.0
    %872 = vmatpush1.msra.mxu0 0.0
    %873 = vmatprep.subr.mxu0 0.0
    %874 = vmatpush1.msra.mxu0 0.0
    %875 = vmatprep.subr.mxu0 0.0
    %876 = vmatpush1.msra.mxu0 0.0
    %877 = vmatprep.subr.mxu0 0.0
    %878 = vmatpush1.msra.mxu0 0.0
    %879 = vmatprep.subr.mxu0 0.0
    %880 = vmatpush1.msra.mxu0 0.0
    %881 = vmatprep.subr.mxu0 0.0
    %882 = vmatpush1.msra.mxu0 0.0
    %883 = vmatprep.subr.mxu0 0.0
    %884 = vmatpush1.msra.mxu0 0.0
    %885 = vmatprep.subr.mxu0 0.0
    %886 = vmatpush1.msra.mxu0 0.0
    %887 = vmatprep.subr.mxu0 0.0
    %888 = vmatpush1.msra.mxu0 0.0
    %889 = vmatprep.subr.mxu0 0.0
    %890 = vmatpush1.msra.mxu0 0.0
    %891 = vmatprep.subr.mxu0 0.0
    %892 = vmatpush1.msra.mxu0 0.0
    %893 = vmatprep.subr.mxu0 0.0
    %894 = vmatpush1.msra.mxu0 0.0
    %895 = vmatprep.subr.mxu0 0.0
    %896 = vmatpush1.msra.mxu0 0.0
    %897 = vmatprep.subr.mxu0 0.0
    %898 = vmatpush1.msra.mxu0 0.0
    %899 = vmatprep.subr.mxu0 0.0
    %900 = vmatpush1.msra.mxu0 0.0
    %901 = vmatprep.subr.mxu0 0.0
    %902 = vmatpush1.msra.mxu0 0.0
    %903 = vmatprep.subr.mxu0 0.0
    %904 = vmatpush1.msra.mxu0 0.0
    %905 = vmatprep.subr.mxu0 0.0
    %906 = vmatpush1.msra.mxu0 0.0
    %907 = vmatprep.subr.mxu0 0.0
    %908 = vmatpush1.msra.mxu0 0.0
    %909 = vmatprep.mubr.f32.mxu0 0.0
    %910 = vmatmul.mubr.f32.gmra.mrb[0].mxu0 %v843
    %v911 = vpop.f32.mrb[0].mxu0
    %v912 = vadd.f32 0.0, %v911
    %v913 = vpop.f32.mrb[0].mxu0
    %v914 = vadd.f32 0.0, %v913
    %915 = vdwg.mxu0
    %v918 = vrot.slane %v912, 4
    %v919 = vrot.slane %v914, 4
    %v922 = vadd.f32 %v148, %v918
    %v923 = vadd.f32 %v150, %v919
    %v924 = vxor.u32 %v922, 2147483648
    %v925 = vxor.u32 %v923, 2147483648
    %v926 = vmul.f32 %v924, 1.442695
    %v927 = vpow.pop %v926
    %v928 = vmul.f32 %v925, 1.442695
    %v929 = vpow.pop %v928
    %v930 = vadd.f32 %v927, 1.0
    %v931 = vadd.f32 %v929, 1.0
    %v932 = vrcp.pop %v930
    %v933 = vmul.f32 1.0, %v932
    %v934 = vrcp.pop %v931
    %v935 = vmul.f32 1.0, %v934
    %v936 = vmul.f32 %v935, 2.0
    %v937 = vsub.f32 %v936, 1.0
    %v939 = vrot.slane %v832, 6
    %v941 = vmul.f32 %v933, %v939
    %v942 = vmul.f32 %v933, %v937
    %944 = vrot.lane.b32.xlu0 %v942, 64
    %v945 = vpop.permute.xlu0 %944
    %v947 = vadd.f32 %v941, %v945
    %v948 = vtanh.pop %v947
    %v949 = vmul.f32 %v935, %v948
    %951 = vrot.lane.b32.xlu0 %v949, 64
    %v952 = vpop.permute.xlu0 %951
    %954 = vst.msk [vmem:[#allocation2 + $0x8] sm:$0x30] %vm501, %v952
    %v955 = vrot.slane %v949, 4
    %956 = vrot.lane.b32.xlu0 %v955, 64
    %v957 = vpop.permute.xlu0 %956
    %v958 = vsel %vm168, %v957, 0
    %960 = vmatprep.subr.mxu0 %v153
    %961 = vmatpush1.msra.mxu0 %v152
    %962 = vmatprep.subr.mxu0 %v155
    %963 = vmatpush1.msra.mxu0 %v154
    %964 = vmatprep.subr.mxu0 %v157
    %965 = vmatpush1.msra.mxu0 %v156
    %966 = vmatprep.subr.mxu0 %v159
    %967 = vmatpush1.msra.mxu0 %v158
    %968 = vmatprep.subr.mxu0 %v161
    %969 = vmatpush1.msra.mxu0 %v160
    %970 = vmatprep.subr.mxu0 %v163
    %971 = vmatpush1.msra.mxu0 %v162
    %972 = vmatprep.subr.mxu0 %v165
    %973 = vmatpush1.msra.mxu0 %v164
    %974 = vmatprep.subr.mxu0 %v167
    %975 = vmatpush1.msra.mxu0 %v166
    %976 = vmatprep.subr.mxu0 0.0
    %977 = vmatpush1.msra.mxu0 0.0
    %978 = vmatprep.subr.mxu0 0.0
    %979 = vmatpush1.msra.mxu0 0.0
    %980 = vmatprep.subr.mxu0 0.0
    %981 = vmatpush1.msra.mxu0 0.0
    %982 = vmatprep.subr.mxu0 0.0
    %983 = vmatpush1.msra.mxu0 0.0
    %984 = vmatprep.subr.mxu0 0.0
    %985 = vmatpush1.msra.mxu0 0.0
    %986 = vmatprep.subr.mxu0 0.0
    %987 = vmatpush1.msra.mxu0 0.0
    %988 = vmatprep.subr.mxu0 0.0
    %989 = vmatpush1.msra.mxu0 0.0
    %990 = vmatprep.subr.mxu0 0.0
    %991 = vmatpush1.msra.mxu0 0.0
    %992 = vmatprep.subr.mxu0 0.0
    %993 = vmatpush1.msra.mxu0 0.0
    %994 = vmatprep.subr.mxu0 0.0
    %995 = vmatpush1.msra.mxu0 0.0
    %996 = vmatprep.subr.mxu0 0.0
    %997 = vmatpush1.msra.mxu0 0.0
    %998 = vmatprep.subr.mxu0 0.0
    %999 = vmatpush1.msra.mxu0 0.0
    %1000 = vmatprep.subr.mxu0 0.0
    %1001 = vmatpush1.msra.mxu0 0.0
    %1002 = vmatprep.subr.mxu0 0.0
    %1003 = vmatpush1.msra.mxu0 0.0
    %1004 = vmatprep.subr.mxu0 0.0
    %1005 = vmatpush1.msra.mxu0 0.0
    %1006 = vmatprep.subr.mxu0 0.0
    %1007 = vmatpush1.msra.mxu0 0.0
    %1008 = vmatprep.subr.mxu0 0.0
    %1009 = vmatpush1.msra.mxu0 0.0
    %1010 = vmatprep.subr.mxu0 0.0
    %1011 = vmatpush1.msra.mxu0 0.0
    %1012 = vmatprep.subr.mxu0 0.0
    %1013 = vmatpush1.msra.mxu0 0.0
    %1014 = vmatprep.subr.mxu0 0.0
    %1015 = vmatpush1.msra.mxu0 0.0
    %1016 = vmatprep.subr.mxu0 0.0
    %1017 = vmatpush1.msra.mxu0 0.0
    %1018 = vmatprep.subr.mxu0 0.0
    %1019 = vmatpush1.msra.mxu0 0.0
    %1020 = vmatprep.subr.mxu0 0.0
    %1021 = vmatpush1.msra.mxu0 0.0
    %1022 = vmatprep.subr.mxu0 0.0
    %1023 = vmatpush1.msra.mxu0 0.0
    %1024 = vmatprep.mubr.f32.mxu0 0.0
    %1025 = vmatmul.mubr.f32.gmra.mrb[0].mxu0 %v958
    %v1026 = vpop.f32.mrb[0].mxu0
    %v1027 = vadd.f32 0.0, %v1026
    %v1028 = vpop.f32.mrb[0].mxu0
    %v1029 = vadd.f32 0.0, %v1028
    %1030 = vdwg.mxu0
    %v1033 = vrot.slane %v1027, 2
    %v1034 = vrot.slane %v1029, 2
    %v1037 = vadd.f32 %v148, %v1033
    %v1038 = vadd.f32 %v150, %v1034
    %v1039 = vxor.u32 %v1037, 2147483648
    %v1040 = vxor.u32 %v1038, 2147483648
    %v1041 = vmul.f32 %v1039, 1.442695
    %v1042 = vpow.pop %v1041
    %v1043 = vmul.f32 %v1040, 1.442695
    %v1044 = vpow.pop %v1043
    %v1045 = vadd.f32 %v1042, 1.0
    %v1046 = vadd.f32 %v1044, 1.0
    %v1047 = vrcp.pop %v1045
    %v1048 = vmul.f32 1.0, %v1047
    %v1049 = vrcp.pop %v1046
    %v1050 = vmul.f32 1.0, %v1049
    %v1051 = vmul.f32 %v1050, 2.0
    %v1052 = vsub.f32 %v1051, 1.0
    %v1054 = vrot.slane %v947, 6
    %v1056 = vmul.f32 %v1048, %v1054
    %v1057 = vmul.f32 %v1048, %v1052
    %1059 = vrot.lane.b32.xlu0 %v1057, 64
    %v1060 = vpop.permute.xlu0 %1059
    %v1062 = vadd.f32 %v1056, %v1060
    %v1063 = vtanh.pop %v1062
    %v1064 = vmul.f32 %v1050, %v1063
    %1066 = vrot.lane.b32.xlu0 %v1064, 64
    %v1067 = vpop.permute.xlu0 %1066
    %1069 = vst.msk [vmem:[#allocation2 + $0x8] sm:$0xc0] %vm617, %v1067
    %v1070 = vld [vmem:[#allocation2] sm:$0xff]
    %v1071 = vld [vmem:[#allocation2 + $0x8] sm:$0xff]
    %v1072 = vld [vmem:[#allocation6] sm:$0xff]
    %v1073 = vld [vmem:[#allocation6 + $0x8] sm:$0xff]
    %v1074 = vld [vmem:[#allocation6 + $0x10] sm:$0xff]
    %v1075 = vld [vmem:[#allocation6 + $0x18] sm:$0xff]
    %v1076 = vld [vmem:[#allocation6 + $0x20] sm:$0xff]
    %v1077 = vld [vmem:[#allocation6 + $0x28] sm:$0xff]
    %v1078 = vld [vmem:[#allocation6 + $0x30] sm:$0xff]
    %v1079 = vld [vmem:[#allocation6 + $0x38] sm:$0xff]
    %v1080 = vld [vmem:[%s5] sm:$0x1]
    %v1082 = vlaneseq
    %v1083 = vshrl.u32 %v1082, 7
    %v1084 = vsub.s32 0, %v1083
    %v1085 = vrot.slane %v1080, %v1084
    %v1088 = vsel %vm168, %v1070, 0
    %v1091 = vsel %vm168, %v1071, 0
    %1093 = vmatprep.subr.mxu0 0.0
    %1094 = vmatpush1.msra.mxu0 %v1072
    %1095 = vmatprep.subr.mxu0 0.0
    %1096 = vmatpush1.msra.mxu0 %v1073
    %1097 = vmatprep.subr.mxu0 0.0
    %1098 = vmatpush1.msra.mxu0 %v1074
    %1099 = vmatprep.subr.mxu0 0.0
    %1100 = vmatpush1.msra.mxu0 %v1075
    %1101 = vmatprep.subr.mxu0 0.0
    %1102 = vmatpush1.msra.mxu0 %v1076
    %1103 = vmatprep.subr.mxu0 0.0
    %1104 = vmatpush1.msra.mxu0 %v1077
    %1105 = vmatprep.subr.mxu0 0.0
    %1106 = vmatpush1.msra.mxu0 %v1078
    %1107 = vmatprep.subr.mxu0 0.0
    %1108 = vmatpush1.msra.mxu0 %v1079
    %1109 = vmatprep.subr.mxu0 0.0
    %1110 = vmatpush1.msra.mxu0 0.0
    %1111 = vmatprep.subr.mxu0 0.0
    %1112 = vmatpush1.msra.mxu0 0.0
    %1113 = vmatprep.subr.mxu0 0.0
    %1114 = vmatpush1.msra.mxu0 0.0
    %1115 = vmatprep.subr.mxu0 0.0
    %1116 = vmatpush1.msra.mxu0 0.0
    %1117 = vmatprep.subr.mxu0 0.0
    %1118 = vmatpush1.msra.mxu0 0.0
    %1119 = vmatprep.subr.mxu0 0.0
    %1120 = vmatpush1.msra.mxu0 0.0
    %1121 = vmatprep.subr.mxu0 0.0
    %1122 = vmatpush1.msra.mxu0 0.0
    %1123 = vmatprep.subr.mxu0 0.0
    %1124 = vmatpush1.msra.mxu0 0.0
    %1125 = vmatprep.subr.mxu0 0.0
    %1126 = vmatpush1.msra.mxu0 0.0
    %1127 = vmatprep.subr.mxu0 0.0
    %1128 = vmatpush1.msra.mxu0 0.0
    %1129 = vmatprep.subr.mxu0 0.0
    %1130 = vmatpush1.msra.mxu0 0.0
    %1131 = vmatprep.subr.mxu0 0.0
    %1132 = vmatpush1.msra.mxu0 0.0
    %1133 = vmatprep.subr.mxu0 0.0
    %1134 = vmatpush1.msra.mxu0 0.0
    %1135 = vmatprep.subr.mxu0 0.0
    %1136 = vmatpush1.msra.mxu0 0.0
    %1137 = vmatprep.subr.mxu0 0.0
    %1138 = vmatpush1.msra.mxu0 0.0
    %1139 = vmatprep.subr.mxu0 0.0
    %1140 = vmatpush1.msra.mxu0 0.0
    %1141 = vmatprep.subr.mxu0 0.0
    %1142 = vmatpush1.msra.mxu0 0.0
    %1143 = vmatprep.subr.mxu0 0.0
    %1144 = vmatpush1.msra.mxu0 0.0
    %1145 = vmatprep.subr.mxu0 0.0
    %1146 = vmatpush1.msra.mxu0 0.0
    %1147 = vmatprep.subr.mxu0 0.0
    %1148 = vmatpush1.msra.mxu0 0.0
    %1149 = vmatprep.subr.mxu0 0.0
    %1150 = vmatpush1.msra.mxu0 0.0
    %1151 = vmatprep.subr.mxu0 0.0
    %1152 = vmatpush1.msra.mxu0 0.0
    %1153 = vmatprep.subr.mxu0 0.0
    %1154 = vmatpush1.msra.mxu0 0.0
    %1155 = vmatprep.subr.mxu0 0.0
    %1156 = vmatpush1.msra.mxu0 0.0
    %1157 = vmatprep.mubr.f32.mxu0 0.0
    %1158 = vmatmul.mubr.f32.gmra.mrb[0].mxu0 %v1088
    %v1159 = vpop.f32.mrb[0].mxu0
    %v1160 = vadd.f32 %v1085, %v1159
    %v1161 = vpop.f32.mrb[0].mxu0
    %1162 = vmatprep.mubr.f32.mxu0 0.0
    %1163 = vmatmul.mubr.f32.gmra.mrb[0].mxu0 %v1091
    %v1164 = vpop.f32.mrb[0].mxu0
    %v1165 = vadd.f32 %v1085, %v1164
    %v1166 = vpop.f32.mrb[0].mxu0
    %1167 = vdwg.mxu0
    %1168 = vst [vmem:[#allocation8] sm:$0xff] %v1160
    %1169 = vst [vmem:[#allocation8 + $0x8] sm:$0xff] %v1165
    // Predicated region
    $region34: #{tpu_custom_call.1} parent=1 // pred_check
      _
    $region35: #{tpu_custom_call.1} parent=1 // pred_check_branch
      %1171 = sbr.rel (0) target = $region37
    $region36: #{tpu_custom_call.1} parent=1 // pred_region
      %s1173 = ssub.s32 256, 256
      %1174 = vsyncadd [#allocation5], %s1173
      %s1175 = sshll.u32 [#allocation8], 4
      %s1176 = int_to_ptr.vmem [resolvable:$true] %s1175
      %1181 = dma.vmem_to_hbm [thread:$0]  %s1176, 256, %s6, [#allocation5], 128, 128, 8
    $region37: #{tpu_custom_call.1} parent=1 // pred_fallthru
      _
    // Predicated region
    $region38: #{tpu_custom_call.1} parent=1 // pred_check
      _
    $region39: #{tpu_custom_call.1} parent=1 // pred_check_branch
      %1183 = sbr.rel (0) target = $region41
    $region40: #{tpu_custom_call.1} parent=1 // pred_region
      %1184 = dma.done [#allocation5], 256
    $region41: #{tpu_custom_call.1} parent=1 // pred_fallthru
      _
    %1185 = vsyncpa [#allocation4], 1
    %1186 = vsyncpa [#allocation7], 1
    %1187 = vsyncpa [#allocation5], 1

</llo_original>
